<compile_context>
chip_gen: v7x
topology: tpu7x:2x2x1
jax: 0.10.0
libtpu: 0.0.40
codegen_flags: <defaults>
</compile_context>

<pallas_src>
import functools
import math

import numpy as np
import jax
import jax.numpy as jnp
from jax.experimental import pallas as pl
from jax.experimental.pallas import tpu as pltpu

MV_DIM = 16      # PGA(3,0,1) multivector dimension
BLADE_LEN = 9    # number of equivariant linear basis maps

# GATR-style inner-product mask: coordinates whose blade does not contain e0.
# basis order: [1, e0, e1, e2, e3, e01, e02, e03, e12, e13, e23,
#               e012, e013, e023, e123, e0123]
INNER_PRODUCT_MASK = np.array(
    [1, 0, 1, 1, 1, 0, 0, 0, 1, 1, 1, 0, 0, 0, 1, 0], dtype=bool)

_MASK_NEG = -1e30   # finite "minus infinity" for padded keys (no -inf - -inf NaN)


def _round_up(x, m):
    return (x + m - 1) // m * m


# ----------------------------------------------------------------------------
# Generation-aware VMEM budgets
# ----------------------------------------------------------------------------
@functools.lru_cache(maxsize=None)
def _vmem_capacity_bytes():
    """Physical per-TensorCore VMEM; falls back to v7x's 64 MiB (conservative)."""
    try:
        info = pltpu.get_tpu_info()
        cap = getattr(info, "vmem_capacity_bytes", None)
        if cap:
            return int(cap)
    except Exception:
        pass
    return 64 << 20


def _vmem_budgets():
    cap = _vmem_capacity_bytes()
    tile_budget = cap // 2                      # used for tile sizing
    vmem_limit = min((cap * 3) // 4, 96 << 20)  # scoped limit handed to Mosaic
    return tile_budget, int(vmem_limit)


# ----------------------------------------------------------------------------
# Tile selection
# ----------------------------------------------------------------------------
def _pick_row_tile(m_rows, k_cols, n_cols_total, budget_bytes):
    """Row tile for the projection matmuls (weights stay resident)."""
    def cost(t):
        # double-buffered bf16 x/out tiles + resident bf16 weight panels
        return 2 * 2 * t * (k_cols + n_cols_total) + 2 * k_cols * n_cols_total

    t = 1024
    # `>=` biases toward >=2 grid cells so both v7x TensorCores stay busy.
    while t > 8 and (cost(t) > budget_bytes or t >= max(16, m_rows)):
        t //= 2
    # prefer a tile that divides the row count (avoids pad + slice HBM passes)
    while t > 8 and m_rows % t != 0:
        t //= 2
    return max(t, 8)


def _choose_seq_tiles(n, dqp, dvp, budget_bytes):
    """Pick (tq, tk, n_pad).  Prefers fully VMEM-resident K/V (tk == n_pad)."""
    n8 = _round_up(max(n, 8), 8)

    def cost(tq, tk):
        return (2 * 2 * tq * (dqp + dvp)      # q block + attn-out block (dbl-buffered bf16)
                + 2 * 2 * tk * (dqp + dvp)    # k + v blocks (dbl-buffered bf16)
                + 4 * tq * (dvp + 2)          # f32 acc / m / l scratch
                + 3 * 4 * tq * tk)            # f32 score / exp intermediates

    # Preferred: K/V grid-invariant (KV axis size 1) -> each k/v element is
    # DMA'd from HBM once per batch instead of once per (head, q_tile).
    tq = 1024
    while tq >= 8:
        tq_eff = n8 if n8 <= tq else tq
        n_pad = _round_up(n8, tq_eff)
        if cost(tq_eff, n_pad) <= budget_bytes:
            return tq_eff, n_pad, n_pad
        tq //= 2

    # Fallback: tile the KV axis as well.
    t = 1024
    while t > 8 and cost(t, t) > budget_bytes:
        t //= 2
    t = n8 if n8 <= t else t
    n_pad = _round_up(n8, t)
    return t, t, n_pad


# ----------------------------------------------------------------------------
# Pallas kernels
# ----------------------------------------------------------------------------
def _multi_proj_kernel(*refs, n_out):
    """One x row-tile against several resident weight panels -> several outputs.

    All weight / output widths are multiples of 128 lanes (zero-padded at prep
    time), so every store is an unmasked lane-dense vst.
    """
    x_ref = refs[0]
    w_refs = refs[1:1 + n_out]
    o_refs = refs[1 + n_out:]
    x = x_ref[...]                                     # bf16 (tm, K)
    for w_ref, o_ref in zip(w_refs, o_refs):
        o_ref[...] = jnp.dot(x, w_ref[...],
                             preferred_element_type=jnp.float32).astype(o_ref.dtype)


def fused_row_matmul(x_bf16, weights, *, out_dtype, budget_bytes, vmem_limit_bytes):
    """outs[i] = x @ weights[i], row-tiled over M; weights stay VMEM-resident."""
    M, K = x_bf16.shape
    n_out = len(weights)
    n_cols = [w.shape[1] for w in weights]
    tm = _pick_row_tile(M, K, sum(n_cols), budget_bytes)
    pad = (-M) % tm
    if pad:
        x_bf16 = jnp.pad(x_bf16, ((0, pad), (0, 0)))
    Mp = M + pad

    kernel = functools.partial(_multi_proj_kernel, n_out=n_out)
    outs = pl.pallas_call(
        kernel,
        out_shape=tuple(jax.ShapeDtypeStruct((Mp, n), out_dtype) for n in n_cols),
        grid=(Mp // tm,),
        in_specs=[pl.BlockSpec((tm, K), lambda i: (i, 0))]
                 + [pl.BlockSpec((K, n), lambda i: (0, 0)) for n in n_cols],
        out_specs=tuple(pl.BlockSpec((tm, n), lambda i: (i, 0)) for n in n_cols),
        compiler_params=pltpu.CompilerParams(
            dimension_semantics=("parallel",),
            vmem_limit_bytes=vmem_limit_bytes),
    )(x_bf16, *weights)
    if pad:
        outs = tuple(o[:M] for o in outs)
    return outs


def _flash_attn_kernel(q_ref, k_ref, v_ref, o_ref, m_sc, l_sc, acc_sc, *,
                       tk, n_valid, mask_kv):
    """Online-softmax attention step for one (batch, head, q_tile, kv_tile) cell.

    1/sqrt(d_k) is folded into the q weights.  Running max / sum / accumulator
    live in VMEM scratch across the innermost ("arbitrary") KV grid axis.
    """
    ki = pl.program_id(3)

    @pl.when(ki == 0)
    def _init():
        m_sc[...] = jnp.full_like(m_sc, -jnp.inf)
        l_sc[...] = jnp.zeros_like(l_sc)
        acc_sc[...] = jnp.zeros_like(acc_sc)

    q = q_ref[...]                                        # (tq, dqp) bf16
    k = k_ref[...]                                        # (tk, dqp) bf16
    s = jax.lax.dot_general(q, k, (((1,), (1,)), ((), ())),
                            preferred_element_type=jnp.float32)   # (tq, tk) f32

    if mask_kv:
        # Padded keys -> large finite negative (exp underflows to 0; a fully
        # masked tile keeps m finite, so alpha never hits -inf - -inf NaN).
        kv_pos = ki * tk + jax.lax.broadcasted_iota(jnp.int32, s.shape, 1)
        s = jnp.where(kv_pos < n_valid, s, _MASK_NEG)

    m_prev = m_sc[...]
    m_new = jnp.maximum(m_prev, jnp.max(s, axis=-1, keepdims=True))
    alpha = jnp.exp(m_prev - m_new)            # == 0 on the first step (m_prev = -inf)
    # TODO(synk): on v6e/v7x the EUP exp over the (tq, tk) tile is the critical
    # slot; a bf16 exp would roughly halve it.  Kept f32 for v5e portability.
    p = jnp.exp(s - m_new)
    l_sc[...] = alpha * l_sc[...] + jnp.sum(p, axis=-1, keepdims=True)
    acc_sc[...] = alpha * acc_sc[...] + jnp.dot(
        p.astype(v_ref.dtype), v_ref[...], preferred_element_type=jnp.float32)
    m_sc[...] = m_new

    @pl.when(ki == pl.num_programs(3) - 1)
    def _finalize():
        inv_l = pl.reciprocal(l_sc[...], approx=True)     # EUP, frees VALU slots
        o_ref[...] = (acc_sc[...] * inv_l).astype(o_ref.dtype)


def flash_sdpa(q, k, v, *, n_heads, dqp, dvp, n_valid, tq, tk, vmem_limit_bytes):
    """q: (B, Np, Nh*dqp); k: (B, Np, dqp); v: (B, Np, dvp) -> (B, Np, Nh*dvp).

    The head is addressed purely through the BlockSpec index on the last axis
    (q/out block width = dqp/dvp), so no transpose is ever materialized.  The
    single k/v "head" index_map depends only on (b, ki); with tk == Np the KV
    grid axis has size 1 and k/v stay VMEM-resident across heads and q tiles.
    """
    B, Npad, _ = q.shape
    grid = (B, n_heads, Npad // tq, Npad // tk)
    kernel = functools.partial(_flash_attn_kernel, tk=tk, n_valid=n_valid,
                               mask_kv=(Npad != n_valid))
    return pl.pallas_call(
        kernel,
        out_shape=jax.ShapeDtypeStruct((B, Npad, n_heads * dvp), jnp.bfloat16),
        grid=grid,
        in_specs=[
            pl.BlockSpec((None, tq, dqp), lambda b, h, qi, ki: (b, qi, h)),
            pl.BlockSpec((None, tk, dqp), lambda b, h, qi, ki: (b, ki, 0)),
            pl.BlockSpec((None, tk, dvp), lambda b, h, qi, ki: (b, ki, 0)),
        ],
        out_specs=pl.BlockSpec((None, tq, dvp), lambda b, h, qi, ki: (b, qi, h)),
        scratch_shapes=[pltpu.VMEM((tq, 1), jnp.float32),    # running max
                        pltpu.VMEM((tq, 1), jnp.float32),    # running sum
                        pltpu.VMEM((tq, dvp), jnp.float32)],  # output accumulator
        compiler_params=pltpu.CompilerParams(
            dimension_semantics=("parallel", "parallel", "parallel", "arbitrary"),
            vmem_limit_bytes=vmem_limit_bytes),
    )(q, k, v)


# ----------------------------------------------------------------------------
# Parameter folding (plain JAX, one-time prep -- off the hot path)
# ----------------------------------------------------------------------------
def fold_equilinear(w, blade, *, coord_sel=None, head_perm=None, scale=None):
    """Fold an EquiLinearLayer einsum into a flat (I*MV, J*Y) matrix.

    w: (J, I, blade_len); blade: (blade_len, MV, MV).
    coord_sel : output-coordinate selection (folds the inner-product mask).
    head_perm : (H, Nh) -> channel j = hd*Nh + head permuted to head-major
                order (folds the prepare_qkv rearrange).
    scale     : optional scalar folded into the weights (softmax 1/sqrt(d_k)).
    """
    hi = jax.lax.Precision.HIGHEST
    m = jnp.einsum('jib,bxy->ixjy', w, blade, precision=hi)   # (I, MV, J, Y)
    if coord_sel is not None:
        m = m[..., coord_sel]
    I, MV_, J, Y = m.shape
    if head_perm is not None:
        H, Nh = head_perm
        m = m.reshape(I, MV_, H, Nh, Y).transpose(0, 1, 3, 2, 4).reshape(I, MV_, J, Y)
    if scale is not None:
        m = m * scale
    return m.reshape(I * MV_, J * Y)


def prepare_params(wq, wk, wv, wo, blade, *, hidden_dim, n_heads):
    """Fold + permute + zero-pad + cast all EquiLinear weights (one-time prep)."""
    sel = np.nonzero(INNER_PRODUCT_MASK)[0]
    n_sel = len(sel)
    H, Nh = hidden_dim, n_heads
    dq, dv = H * n_sel, H * MV_DIM
    dqp, dvp = _round_up(dq, 128), _round_up(dv, 128)
    scale = 1.0 / math.sqrt(dq)

    # q: selection + head-major permutation + 1/sqrt(d_k) folded; each head's
    # dq-wide block zero-padded to dqp (zero columns -> zero score contribution).
    wq_f = fold_equilinear(wq, blade, coord_sel=sel, head_perm=(H, Nh),
                           scale=scale)                           # (K, Nh*dq)
    K = wq_f.shape[0]
    wq_f = jnp.pad(wq_f.reshape(K, Nh, dq),
                   ((0, 0), (0, 0), (0, dqp - dq))).reshape(K, Nh * dqp)

    wk_f = jnp.pad(fold_equilinear(wk, blade, coord_sel=sel),
                   ((0, 0), (0, dqp - dq)))                       # (K, dqp)
    wv_f = jnp.pad(fold_equilinear(wv, blade),
                   ((0, 0), (0, dvp - dv)))                       # (K, dvp)

    # Output projection: input rows ordered (head, hidden, mv); zero rows are
    # inserted for the per-head v padding, output columns padded to 128 lanes.
    wo_f = fold_equilinear(wo, blade)                             # (Nh*dv, C_out*MV)
    n_out_cols = wo_f.shape[1]
    wo_f = wo_f.reshape(Nh, dv, n_out_cols)
    wo_f = jnp.pad(wo_f, ((0, 0), (0, dvp - dv), (0, (-n_out_cols) % 128)))
    wo_f = wo_f.reshape(Nh * dvp, -1)

    return {"w_q": wq_f.astype(jnp.bfloat16),
            "w_k": wk_f.astype(jnp.bfloat16),
            "w_v": wv_f.astype(jnp.bfloat16),
            "w_out": wo_f.astype(jnp.bfloat16)}


# ----------------------------------------------------------------------------
# Forward pass
# ----------------------------------------------------------------------------
def geometric_attention_forward(x, params, *, hidden_dim, n_heads, out_channels):
    B, N, C_in, MV = x.shape
    H, Nh = hidden_dim, n_heads
    n_sel = int(INNER_PRODUCT_MASK.sum())
    dq, dv = H * n_sel, H * MV
    dqp, dvp = _round_up(dq, 128), _round_up(dv, 128)

    tile_budget, vmem_limit = _vmem_budgets()
    tq, tk, n_pad = _choose_seq_tiles(N, dqp, dvp, tile_budget)

    if n_pad != N:
        x = jnp.pad(x, ((0, 0), (0, n_pad - N), (0, 0), (0, 0)))

    # Fused q/k/v projection: x read once per row tile, three lane-dense outputs
    # already in the layouts the attention kernel consumes (no XLA slices,
    # reshapes below are metadata-only on contiguous arrays).
    x_flat = x.reshape(B * n_pad, C_in * MV).astype(jnp.bfloat16)
    q2d, k2d, v2d = fused_row_matmul(
        x_flat, (params["w_q"], params["w_k"], params["w_v"]),
        out_dtype=jnp.bfloat16, budget_bytes=tile_budget,
        vmem_limit_bytes=vmem_limit)

    q = q2d.reshape(B, n_pad, Nh * dqp)
    k = k2d.reshape(B, n_pad, dqp)
    v = v2d.reshape(B, n_pad, dvp)

    attn = flash_sdpa(q, k, v, n_heads=Nh, dqp=dqp, dvp=dvp, n_valid=N,
                      tq=tq, tk=tk, vmem_limit_bytes=vmem_limit)   # (B, Np, Nh*dvp)

    # Output projection directly on the (head, hidden, mv [+ zero pad]) layout;
    # the matching zero rows were inserted into w_out at prep time.
    attn_rows = attn.reshape(B * n_pad, Nh * dvp)
    (out,) = fused_row_matmul(attn_rows, (params["w_out"],),
                              out_dtype=jnp.float32, budget_bytes=tile_budget,
                              vmem_limit_bytes=vmem_limit)

    out = out.reshape(B, n_pad, -1)[:, :N, :out_channels * MV]
    return out.reshape(B, N, out_channels, MV)


# ----------------------------------------------------------------------------
# Pure-JAX reference (mirrors the PyTorch forward exactly, f32 HIGHEST)
# ----------------------------------------------------------------------------
def reference_forward(x, wq, wk, wv, wo, blade, hidden_dim, n_heads):
    hi = jax.lax.Precision.HIGHEST
    H, Nh = hidden_dim, n_heads
    B, N, C_in, MV = x.shape
    equi = lambda w, xx: jnp.einsum('jib,bxy,...ix->...jy', w, blade, xx,
                                    precision=hi)
    q, k, v = equi(wq, x), equi(wk, x), equi(wv, x)
    q = q.reshape(B, N, H, Nh, MV).transpose(0, 3, 1, 2, 4)
    k = k[:, None]
    v = v[:, None]
    sel = np.nonzero(INNER_PRODUCT_MASK)[0]
    n_sel = len(sel)
    qs = q[..., sel].reshape(B, Nh, N, H * n_sel)
    ks = jnp.broadcast_to(k[..., sel].reshape(B, 1, N, H * n_sel),
                          (B, Nh, N, H * n_sel))
    vf = jnp.broadcast_to(v.reshape(B, 1, N, H * MV), (B, Nh, N, H * MV))
    scale = 1.0 / math.sqrt(qs.shape[-1])
    s = jnp.einsum('bhqd,bhkd->bhqk', qs, ks, precision=hi) * scale
    p = jax.nn.softmax(s, axis=-1)
    a = jnp.einsum('bhqk,bhkd->bhqd', p, vf, precision=hi)
    amv = a[..., :H * MV].reshape(B, Nh, N, H, MV)
    amv = amv.transpose(0, 2, 1, 3, 4).reshape(B, N, Nh * H, MV)
    return equi(wo, amv)


# ----------------------------------------------------------------------------
if __name__ == "__main__":
    B, N = 2, 8                          # batch, items (sequence)
    C_in, H, Nh, C_out = 4, 4, 2, 4      # mv_channels, hidden_dim, n_heads, out_channels

    key = jax.random.PRNGKey(0)
    k0, k1, k2, k3, k4, k5 = jax.random.split(key, 6)

    # Deterministic synthetic blade operator + parameters (torch.rand -> U[0,1))
    blade = jax.random.normal(k0, (BLADE_LEN, MV_DIM, MV_DIM), jnp.float32) * 0.1
    wq = jax.random.uniform(k1, (H * Nh, C_in, BLADE_LEN), jnp.float32)
    wk = jax.random.uniform(k2, (H, C_in, BLADE_LEN), jnp.float32)
    wv = jax.random.uniform(k3, (H, C_in, BLADE_LEN), jnp.float32)
    wo = jax.random.uniform(k4, (C_out, H * Nh, BLADE_LEN), jnp.float32)

    x = jax.random.normal(k5, (B, N, C_in, MV_DIM), jnp.float32)

    params = prepare_params(wq, wk, wv, wo, blade, hidden_dim=H, n_heads=Nh)
    fwd = jax.jit(functools.partial(geometric_attention_forward,
                                    hidden_dim=H, n_heads=Nh, out_channels=C_out))
    out = jax.block_until_ready(fwd(x, params))

    ref = jax.block_until_ready(
        reference_forward(x, wq, wk, wv, wo, blade, H, Nh))

    assert out.shape == (B, N, C_out, MV_DIM), out.shape

    out_np, ref_np = np.asarray(out, np.float64), np.asarray(ref, np.float64)
    # Kernel uses bf16 MXU operands, bf16-folded scale and approx reciprocal vs
    # an f32 HIGHEST reference, so tolerances are loosened accordingly; the
    # norm-relative check is the tighter aggregate gate.
    rel_err = np.linalg.norm(out_np - ref_np) / np.linalg.norm(ref_np)
    assert rel_err < 4e-2, f"relative Frobenius error too large: {rel_err}"
    np.testing.assert_allclose(out_np, ref_np, rtol=7.5e-2, atol=3e-1)
    print("KERNEL_OK")
</pallas_src>

<mosaic_0001>
module attributes {stable_mosaic.version = 11 : i64} {
  func.func @_multi_proj_kernel(%arg0: i32, %arg1: memref<8x64xbf16, #tpu.memory_space<vmem>>, %arg2: memref<64x256xbf16, #tpu.memory_space<vmem>>, %arg3: memref<64x128xbf16, #tpu.memory_space<vmem>>, %arg4: memref<64x128xbf16, #tpu.memory_space<vmem>>, %arg5: memref<8x256xbf16, #tpu.memory_space<vmem>>, %arg6: memref<8x128xbf16, #tpu.memory_space<vmem>>, %arg7: memref<8x128xbf16, #tpu.memory_space<vmem>>) attributes {dimension_semantics = [#tpu.dimension_semantics<parallel>], iteration_bounds = array<i64: 2>, scalar_prefetch = 0 : i64, scratch_operands = 0 : i64, tpu.core_type = #tpu.core_type<tc>, window_params = [{transform_indices = @transform_0, window_bounds = array<i64: 8, 64>}, {pipeline_mode = #tpu.pipeline_mode<synchronous>, transform_indices = @transform_1, window_bounds = array<i64: 64, 256>}, {pipeline_mode = #tpu.pipeline_mode<synchronous>, transform_indices = @transform_2, window_bounds = array<i64: 64, 128>}, {pipeline_mode = #tpu.pipeline_mode<synchronous>, transform_indices = @transform_3, window_bounds = array<i64: 64, 128>}, {transform_indices = @transform_4, window_bounds = array<i64: 8, 256>}, {transform_indices = @transform_5, window_bounds = array<i64: 8, 128>}, {transform_indices = @transform_6, window_bounds = array<i64: 8, 128>}]} {
    %c0 = arith.constant 0 : index
    %c0_0 = arith.constant 0 : index
    %0 = vector.load %arg1[%c0, %c0_0] : memref<8x64xbf16, #tpu.memory_space<vmem>>, vector<8x64xbf16>
    %c0_1 = arith.constant 0 : index
    %c0_2 = arith.constant 0 : index
    %1 = vector.load %arg2[%c0_1, %c0_2] : memref<64x256xbf16, #tpu.memory_space<vmem>>, vector<64x256xbf16>
    %cst = arith.constant dense<0.000000e+00> : vector<8x256xf32>
    %2 = tpu.matmul %0, %1, %cst {dimension_numbers = #tpu.dot_dimension_numbers<[1], [0], [0], [1], [0, 0, 1, 1], [], []>} : vector<8x64xbf16>, vector<64x256xbf16>, vector<8x256xf32> -> vector<8x256xf32>
    %3 = arith.truncf %2 : vector<8x256xf32> to vector<8x256xbf16>
    %c0_3 = arith.constant 0 : index
    %c0_4 = arith.constant 0 : index
    %4 = vector.load %arg5[%c0_3, %c0_4] : memref<8x256xbf16, #tpu.memory_space<vmem>>, vector<8x256xbf16>
    tpu.vector_store %arg5[%c0_3, %c0_4], %3 {strides = array<i32>} : memref<8x256xbf16, #tpu.memory_space<vmem>>, vector<8x256xbf16>,
    %c0_5 = arith.constant 0 : index
    %c0_6 = arith.constant 0 : index
    %5 = vector.load %arg3[%c0_5, %c0_6] : memref<64x128xbf16, #tpu.memory_space<vmem>>, vector<64x128xbf16>
    %cst_7 = arith.constant dense<0.000000e+00> : vector<8x128xf32>
    %6 = tpu.matmul %0, %5, %cst_7 {dimension_numbers = #tpu.dot_dimension_numbers<[1], [0], [0], [1], [0, 0, 1, 1], [], []>} : vector<8x64xbf16>, vector<64x128xbf16>, vector<8x128xf32> -> vector<8x128xf32>
    %7 = arith.truncf %6 : vector<8x128xf32> to vector<8x128xbf16>
    %c0_8 = arith.constant 0 : index
    %c0_9 = arith.constant 0 : index
    %8 = vector.load %arg6[%c0_8, %c0_9] : memref<8x128xbf16, #tpu.memory_space<vmem>>, vector<8x128xbf16>
    tpu.vector_store %arg6[%c0_8, %c0_9], %7 {strides = array<i32>} : memref<8x128xbf16, #tpu.memory_space<vmem>>, vector<8x128xbf16>,
    %c0_10 = arith.constant 0 : index
    %c0_11 = arith.constant 0 : index
    %9 = vector.load %arg4[%c0_10, %c0_11] : memref<64x128xbf16, #tpu.memory_space<vmem>>, vector<64x128xbf16>
    %cst_12 = arith.constant dense<0.000000e+00> : vector<8x128xf32>
    %10 = tpu.matmul %0, %9, %cst_12 {dimension_numbers = #tpu.dot_dimension_numbers<[1], [0], [0], [1], [0, 0, 1, 1], [], []>} : vector<8x64xbf16>, vector<64x128xbf16>, vector<8x128xf32> -> vector<8x128xf32>
    %11 = arith.truncf %10 : vector<8x128xf32> to vector<8x128xbf16>
    %c0_13 = arith.constant 0 : index
    %c0_14 = arith.constant 0 : index
    %12 = vector.load %arg7[%c0_13, %c0_14] : memref<8x128xbf16, #tpu.memory_space<vmem>>, vector<8x128xbf16>
    tpu.vector_store %arg7[%c0_13, %c0_14], %11 {strides = array<i32>} : memref<8x128xbf16, #tpu.memory_space<vmem>>, vector<8x128xbf16>,
    return
  }
  func.func @transform_0(%arg0: i32) -> (i32, i32) {
    %c0_i32 = arith.constant 0 : i32
    %c0_i32_0 = arith.constant 0 : i32
    return %arg0, %c0_i32 : i32, i32
  }
  func.func @transform_1(%arg0: i32) -> (i32, i32) {
    %c0_i32 = arith.constant 0 : i32
    %c0_i32_0 = arith.constant 0 : i32
    %c0_i32_1 = arith.constant 0 : i32
    return %c0_i32, %c0_i32_0 : i32, i32
  }
  func.func @transform_2(%arg0: i32) -> (i32, i32) {
    %c0_i32 = arith.constant 0 : i32
    %c0_i32_0 = arith.constant 0 : i32
    %c0_i32_1 = arith.constant 0 : i32
    return %c0_i32, %c0_i32_0 : i32, i32
  }
  func.func @transform_3(%arg0: i32) -> (i32, i32) {
    %c0_i32 = arith.constant 0 : i32
    %c0_i32_0 = arith.constant 0 : i32
    %c0_i32_1 = arith.constant 0 : i32
    return %c0_i32, %c0_i32_0 : i32, i32
  }
  func.func @transform_4(%arg0: i32) -> (i32, i32) {
    %c0_i32 = arith.constant 0 : i32
    %c0_i32_0 = arith.constant 0 : i32
    return %arg0, %c0_i32 : i32, i32
  }
  func.func @transform_5(%arg0: i32) -> (i32, i32) {
    %c0_i32 = arith.constant 0 : i32
    %c0_i32_0 = arith.constant 0 : i32
    return %arg0, %c0_i32 : i32, i32
  }
  func.func @transform_6(%arg0: i32) -> (i32, i32) {
    %c0_i32 = arith.constant 0 : i32
    %c0_i32_0 = arith.constant 0 : i32
    return %arg0, %c0_i32 : i32, i32
  }
}

module attributes {stable_mosaic.version = 11 : i64} {
  func.func @_flash_attn_kernel(%arg0: i32, %arg1: i32, %arg2: i32, %arg3: i32, %arg4: memref<1x8x128xbf16, #tpu.memory_space<vmem>>, %arg5: memref<1x8x128xbf16, #tpu.memory_space<vmem>>, %arg6: memref<1x8x128xbf16, #tpu.memory_space<vmem>>, %arg7: memref<1x8x128xbf16, #tpu.memory_space<vmem>>, %arg8: memref<8x1xf32, #tpu.memory_space<vmem>>, %arg9: memref<8x1xf32, #tpu.memory_space<vmem>>, %arg10: memref<8x128xf32, #tpu.memory_space<vmem>>) attributes {dimension_semantics = [#tpu.dimension_semantics<parallel>, #tpu.dimension_semantics<parallel>, #tpu.dimension_semantics<parallel>, #tpu.dimension_semantics<arbitrary>], iteration_bounds = array<i64: 2, 2, 1, 1>, scalar_prefetch = 0 : i64, scratch_operands = 3 : i64, tpu.core_type = #tpu.core_type<tc>, window_params = [{transform_indices = @transform_0, window_bounds = array<i64: 1, 8, 128>}, {transform_indices = @transform_1, window_bounds = array<i64: 1, 8, 128>}, {transform_indices = @transform_2, window_bounds = array<i64: 1, 8, 128>}, {transform_indices = @transform_3, window_bounds = array<i64: 1, 8, 128>}]} {
    %c0_i32 = arith.constant 0 : i32
    %0 = arith.cmpi eq, %arg3, %c0_i32 : i32
    %1 = arith.extui %0 : i1 to i32
    %c0_i32_0 = arith.constant 0 : i32
    %2 = arith.cmpi ne, %1, %c0_i32_0 : i32
    scf.if %2 {
      %cst_26 = arith.constant 0xFF800000 : f32
      %36 = vector.broadcast %cst_26 : f32 to vector<8x1xf32>
      %c0_27 = arith.constant 0 : index
      %c0_28 = arith.constant 0 : index
      %37 = vector.load %arg8[%c0_27, %c0_28] : memref<8x1xf32, #tpu.memory_space<vmem>>, vector<8x1xf32>
      tpu.vector_store %arg8[%c0_27, %c0_28], %36 {strides = array<i32>} : memref<8x1xf32, #tpu.memory_space<vmem>>, vector<8x1xf32>,
      %cst_29 = arith.constant 0.000000e+00 : f32
      %38 = vector.broadcast %cst_29 : f32 to vector<8x1xf32>
      %c0_30 = arith.constant 0 : index
      %c0_31 = arith.constant 0 : index
      %39 = vector.load %arg9[%c0_30, %c0_31] : memref<8x1xf32, #tpu.memory_space<vmem>>, vector<8x1xf32>
      tpu.vector_store %arg9[%c0_30, %c0_31], %38 {strides = array<i32>} : memref<8x1xf32, #tpu.memory_space<vmem>>, vector<8x1xf32>,
      %cst_32 = arith.constant 0.000000e+00 : f32
      %40 = vector.broadcast %cst_32 : f32 to vector<8x128xf32>
      %c0_33 = arith.constant 0 : index
      %c0_34 = arith.constant 0 : index
      %41 = vector.load %arg10[%c0_33, %c0_34] : memref<8x128xf32, #tpu.memory_space<vmem>>, vector<8x128xf32>
      tpu.vector_store %arg10[%c0_33, %c0_34], %40 {strides = array<i32>} : memref<8x128xf32, #tpu.memory_space<vmem>>, vector<8x128xf32>,
    } else {
    }
    %c0 = arith.constant 0 : index
    %c0_1 = arith.constant 0 : index
    %c0_2 = arith.constant 0 : index
    %3 = vector.load %arg4[%c0, %c0_1, %c0_2] : memref<1x8x128xbf16, #tpu.memory_space<vmem>>, vector<1x8x128xbf16>
    %4 = vector.shape_cast %3 : vector<1x8x128xbf16> to vector<8x128xbf16>
    %c0_3 = arith.constant 0 : index
    %c0_4 = arith.constant 0 : index
    %c0_5 = arith.constant 0 : index
    %5 = vector.load %arg5[%c0_3, %c0_4, %c0_5] : memref<1x8x128xbf16, #tpu.memory_space<vmem>>, vector<1x8x128xbf16>
    %6 = vector.shape_cast %5 : vector<1x8x128xbf16> to vector<8x128xbf16>
    %cst = arith.constant dense<0.000000e+00> : vector<8x8xf32>
    %7 = tpu.matmul %4, %6, %cst {dimension_numbers = #tpu.dot_dimension_numbers<[1], [1], [0], [0], [0, 0, 1, 0], [], []>} : vector<8x128xbf16>, vector<8x128xbf16>, vector<8x8xf32> -> vector<8x8xf32>
    %c0_6 = arith.constant 0 : index
    %c0_7 = arith.constant 0 : index
    %8 = vector.load %arg8[%c0_6, %c0_7] : memref<8x1xf32, #tpu.memory_space<vmem>>, vector<8x1xf32>
    %cst_8 = arith.constant dense<0xFF800000> : vector<8xf32>
    %9 = vector.multi_reduction <maximumf>, %7, %cst_8 [1] : vector<8x8xf32> to vector<8xf32>
    %10 = vector.shape_cast %9 : vector<8xf32> to vector<8x1xf32>
    %11 = arith.maximumf %8, %10 : vector<8x1xf32>
    %12 = arith.subf %8, %11 : vector<8x1xf32>
    %13 = math.exp %12 : vector<8x1xf32>
    %14 = vector.broadcast %11 : vector<8x1xf32> to vector<8x8xf32>
    %15 = arith.subf %7, %14 : vector<8x8xf32>
    %16 = math.exp %15 : vector<8x8xf32>
    %c0_9 = arith.constant 0 : index
    %c0_10 = arith.constant 0 : index
    %17 = vector.load %arg9[%c0_9, %c0_10] : memref<8x1xf32, #tpu.memory_space<vmem>>, vector<8x1xf32>
    %18 = arith.mulf %13, %17 : vector<8x1xf32>
    %cst_11 = arith.constant dense<0.000000e+00> : vector<8xf32>
    %19 = vector.multi_reduction <add>, %16, %cst_11 [1] : vector<8x8xf32> to vector<8xf32>
    %20 = vector.shape_cast %19 : vector<8xf32> to vector<8x1xf32>
    %21 = arith.addf %18, %20 : vector<8x1xf32>
    %c0_12 = arith.constant 0 : index
    %c0_13 = arith.constant 0 : index
    %22 = vector.load %arg9[%c0_12, %c0_13] : memref<8x1xf32, #tpu.memory_space<vmem>>, vector<8x1xf32>
    tpu.vector_store %arg9[%c0_12, %c0_13], %21 {strides = array<i32>} : memref<8x1xf32, #tpu.memory_space<vmem>>, vector<8x1xf32>,
    %c0_14 = arith.constant 0 : index
    %c0_15 = arith.constant 0 : index
    %23 = vector.load %arg10[%c0_14, %c0_15] : memref<8x128xf32, #tpu.memory_space<vmem>>, vector<8x128xf32>
    %24 = vector.broadcast %13 : vector<8x1xf32> to vector<8x128xf32>
    %25 = arith.mulf %24, %23 : vector<8x128xf32>
    %26 = arith.truncf %16 : vector<8x8xf32> to vector<8x8xbf16>
    %c0_16 = arith.constant 0 : index
    %c0_17 = arith.constant 0 : index
    %c0_18 = arith.constant 0 : index
    %27 = vector.load %arg6[%c0_16, %c0_17, %c0_18] : memref<1x8x128xbf16, #tpu.memory_space<vmem>>, vector<1x8x128xbf16>
    %28 = vector.shape_cast %27 : vector<1x8x128xbf16> to vector<8x128xbf16>
    %cst_19 = arith.constant dense<0.000000e+00> : vector<8x128xf32>
    %29 = tpu.matmul %26, %28, %cst_19 {dimension_numbers = #tpu.dot_dimension_numbers<[1], [0], [0], [1], [0, 0, 1, 1], [], []>} : vector<8x8xbf16>, vector<8x128xbf16>, vector<8x128xf32> -> vector<8x128xf32>
    %30 = arith.addf %25, %29 : vector<8x128xf32>
    %c0_20 = arith.constant 0 : index
    %c0_21 = arith.constant 0 : index
    %31 = vector.load %arg10[%c0_20, %c0_21] : memref<8x128xf32, #tpu.memory_space<vmem>>, vector<8x128xf32>
    tpu.vector_store %arg10[%c0_20, %c0_21], %30 {strides = array<i32>} : memref<8x128xf32, #tpu.memory_space<vmem>>, vector<8x128xf32>,
    %c0_22 = arith.constant 0 : index
    %c0_23 = arith.constant 0 : index
    %32 = vector.load %arg8[%c0_22, %c0_23] : memref<8x1xf32, #tpu.memory_space<vmem>>, vector<8x1xf32>
    tpu.vector_store %arg8[%c0_22, %c0_23], %11 {strides = array<i32>} : memref<8x1xf32, #tpu.memory_space<vmem>>, vector<8x1xf32>,
    %c0_i32_24 = arith.constant 0 : i32
    %33 = arith.cmpi eq, %arg3, %c0_i32_24 : i32
    %34 = arith.extui %33 : i1 to i32
    %c0_i32_25 = arith.constant 0 : i32
    %35 = arith.cmpi ne, %34, %c0_i32_25 : i32
    scf.if %35 {
      %c0_26 = arith.constant 0 : index
      %c0_27 = arith.constant 0 : index
      %36 = vector.load %arg9[%c0_26, %c0_27] : memref<8x1xf32, #tpu.memory_space<vmem>>, vector<8x1xf32>
      %37 = tpu.reciprocal %36 {approx = true} : vector<8x1xf32> -> vector<8x1xf32>
      %c0_28 = arith.constant 0 : index
      %c0_29 = arith.constant 0 : index
      %38 = vector.load %arg10[%c0_28, %c0_29] : memref<8x128xf32, #tpu.memory_space<vmem>>, vector<8x128xf32>
      %39 = vector.broadcast %37 : vector<8x1xf32> to vector<8x128xf32>
      %40 = arith.mulf %38, %39 : vector<8x128xf32>
      %41 = arith.truncf %40 : vector<8x128xf32> to vector<8x128xbf16>
      %c0_30 = arith.constant 0 : index
      %c0_31 = arith.constant 0 : index
      %c0_32 = arith.constant 0 : index
      %42 = vector.load %arg7[%c0_30, %c0_31, %c0_32] : memref<1x8x128xbf16, #tpu.memory_space<vmem>>, vector<1x8x128xbf16>
      %43 = vector.shape_cast %42 : vector<1x8x128xbf16> to vector<8x128xbf16>
      %44 = vector.shape_cast %41 : vector<8x128xbf16> to vector<1x8x128xbf16>
      tpu.vector_store %arg7[%c0_30, %c0_31, %c0_32], %44 {strides = array<i32>} : memref<1x8x128xbf16, #tpu.memory_space<vmem>>, vector<1x8x128xbf16>,
    } else {
    }
    return
  }
  func.func @transform_0(%arg0: i32, %arg1: i32, %arg2: i32, %arg3: i32) -> (i32, i32, i32) {
    %c0_i32 = arith.constant 0 : i32
    return %arg0, %arg2, %arg1 : i32, i32, i32
  }
  func.func @transform_1(%arg0: i32, %arg1: i32, %arg2: i32, %arg3: i32) -> (i32, i32, i32) {
    %c0_i32 = arith.constant 0 : i32
    %c0_i32_0 = arith.constant 0 : i32
    return %arg0, %arg3, %c0_i32 : i32, i32, i32
  }
  func.func @transform_2(%arg0: i32, %arg1: i32, %arg2: i32, %arg3: i32) -> (i32, i32, i32) {
    %c0_i32 = arith.constant 0 : i32
    %c0_i32_0 = arith.constant 0 : i32
    return %arg0, %arg3, %c0_i32 : i32, i32, i32
  }
  func.func @transform_3(%arg0: i32, %arg1: i32, %arg2: i32, %arg3: i32) -> (i32, i32, i32) {
    %c0_i32 = arith.constant 0 : i32
    return %arg0, %arg2, %arg1 : i32, i32, i32
  }
}

module attributes {stable_mosaic.version = 11 : i64} {
  func.func @_multi_proj_kernel(%arg0: i32, %arg1: memref<8x256xbf16, #tpu.memory_space<vmem>>, %arg2: memref<256x128xbf16, #tpu.memory_space<vmem>>, %arg3: memref<8x128xf32, #tpu.memory_space<vmem>>) attributes {dimension_semantics = [#tpu.dimension_semantics<parallel>], iteration_bounds = array<i64: 2>, scalar_prefetch = 0 : i64, scratch_operands = 0 : i64, tpu.core_type = #tpu.core_type<tc>, window_params = [{transform_indices = @transform_0, window_bounds = array<i64: 8, 256>}, {pipeline_mode = #tpu.pipeline_mode<synchronous>, transform_indices = @transform_1, window_bounds = array<i64: 256, 128>}, {transform_indices = @transform_2, window_bounds = array<i64: 8, 128>}]} {
    %c0 = arith.constant 0 : index
    %c0_0 = arith.constant 0 : index
    %0 = vector.load %arg1[%c0, %c0_0] : memref<8x256xbf16, #tpu.memory_space<vmem>>, vector<8x256xbf16>
    %c0_1 = arith.constant 0 : index
    %c0_2 = arith.constant 0 : index
    %1 = vector.load %arg2[%c0_1, %c0_2] : memref<256x128xbf16, #tpu.memory_space<vmem>>, vector<256x128xbf16>
    %cst = arith.constant dense<0.000000e+00> : vector<8x128xf32>
    %2 = tpu.matmul %0, %1, %cst {dimension_numbers = #tpu.dot_dimension_numbers<[1], [0], [0], [1], [0, 0, 1, 1], [], []>} : vector<8x256xbf16>, vector<256x128xbf16>, vector<8x128xf32> -> vector<8x128xf32>
    %c0_3 = arith.constant 0 : index
    %c0_4 = arith.constant 0 : index
    %3 = vector.load %arg3[%c0_3, %c0_4] : memref<8x128xf32, #tpu.memory_space<vmem>>, vector<8x128xf32>
    tpu.vector_store %arg3[%c0_3, %c0_4], %2 {strides = array<i32>} : memref<8x128xf32, #tpu.memory_space<vmem>>, vector<8x128xf32>,
    return
  }
  func.func @transform_0(%arg0: i32) -> (i32, i32) {
    %c0_i32 = arith.constant 0 : i32
    %c0_i32_0 = arith.constant 0 : i32
    return %arg0, %c0_i32 : i32, i32
  }
  func.func @transform_1(%arg0: i32) -> (i32, i32) {
    %c0_i32 = arith.constant 0 : i32
    %c0_i32_0 = arith.constant 0 : i32
    %c0_i32_1 = arith.constant 0 : i32
    return %c0_i32, %c0_i32_0 : i32, i32
  }
  func.func @transform_2(%arg0: i32) -> (i32, i32) {
    %c0_i32 = arith.constant 0 : i32
    %c0_i32_0 = arith.constant 0 : i32
    return %arg0, %c0_i32 : i32, i32
  }
}

</mosaic_0001>

<llo_original>
// kernel: geometric_attention_forward.5
$region0: #{geometric_attention_forward.5}
  #allocation0 [shape = 'u32[]', space=smem, size = 0x4, offset = 0x4, fixed_abs, tag = 'smem constant byte address 0x4 - core index']
  #allocation1 [shape = 'u32[144,128]{1,0:T(1,128)}', space=vmem, size = 0x12000, scoped, tag = 'internal scratch']
  %s0 = inlined_call_operand.vmem [shape: bf16[16,256], index: 0, kind: input, shape index: {}]
  %s1 = inlined_call_operand.vmem [shape: bf16[256,128], index: 1, kind: input, shape index: {}]
  %s2 = inlined_call_operand.vmem [shape: f32[16,128], index: 2, kind: output, shape index: {}]
  %s3 = sld [smem:[#allocation0]]
  $region41: #{geometric_attention_forward.5} parent=0
    _
  %s5 = ssub.s32 1, %s3
  %s6 = scalar_select 0, %s5, %s3
  loop: start=0, step=1, limit=4
  $region2: #{geometric_attention_forward.5} parent=0 // loop_pre_header
    _
  $region3: #{geometric_attention_forward.5} parent=0 // loop_header
    %s8 = sphi 0, %s12
    %p9 = scmp.ge.s32.totalorder %s8, 4
    %s18 = sphi 0, %s20
    %s21 = sphi 0, %s18
    %s22 = sphi 0, %s21
    %s38 = sphi 0, %s22
    %s42 = sphi 0, %s42
    %s44 = sphi 0, %s42
    %s45 = sphi 0, %s44
    %s59 = sphi 0, %s45
    %s65 = sphi 0, %s67
    %s68 = sphi 0, %s65
    %s69 = sphi 0, %s68
    %s85 = sphi 0, %s69
  $region4: #{geometric_attention_forward.5} parent=0 // loop_header_branch
    %11 = sbr.rel (%p9) target = $region8
  $region5: #{geometric_attention_forward.5} parent=0 // loop_body
    %s13 = ssub.s32 %s8, 1
    %s14 = ssub.s32 %s8, 2
    %s15 = sadd.s32 %s8, 1
    %s16 = ssub.s32 %s8, %s15
    %p17 = scmp.eq.s32.totalorder %s16, 0
    %s19 = sadd.s32 %s18, 1
    %s20 = scalar_select %p17, %s18, %s19
    %p23 = pneg %p17
    %p24 = scmp.eq.s32.totalorder %s8, 1
    %p25 = por %p23, %p24
    %p26 = scmp.ne.s32.totalorder %s18, %s21
    %p27 = scmp.eq.s32.totalorder %s8, 0
    %p28 = por %p26, %p27
    %p29 = scmp.ne.s32.totalorder %s18, %s21
    %p30 = scmp.eq.s32.totalorder %s13, 1
    %p31 = por %p29, %p30
    %p32 = scmp.ne.s32.totalorder %s21, %s22
    %p33 = scmp.eq.s32.totalorder %s13, 0
    %p34 = por %p32, %p33
    %p35 = scmp.ne.s32.totalorder %s21, %s22
    %p36 = scmp.eq.s32.totalorder %s14, 1
    %p37 = por %p35, %p36
    %p39 = scmp.ne.s32.totalorder %s22, %s38
    %p40 = scmp.eq.s32.totalorder %s14, 0
    %p41 = por %p39, %p40
    %s43 = sadd.s32 %s42, 1
    %p46 = scmp.eq.s32.totalorder %s8, 1
    %p47 = scmp.ne.s32.totalorder %s42, %s44
    %p48 = scmp.eq.s32.totalorder %s8, 0
    %p49 = por %p47, %p48
    %p50 = scmp.ne.s32.totalorder %s42, %s44
    %p51 = scmp.eq.s32.totalorder %s13, 1
    %p52 = por %p50, %p51
    %p53 = scmp.ne.s32.totalorder %s44, %s45
    %p54 = scmp.eq.s32.totalorder %s13, 0
    %p55 = por %p53, %p54
    %p56 = scmp.ne.s32.totalorder %s44, %s45
    %p57 = scmp.eq.s32.totalorder %s14, 1
    %p58 = por %p56, %p57
    %p60 = scmp.ne.s32.totalorder %s45, %s59
    %p61 = scmp.eq.s32.totalorder %s14, 0
    %p62 = por %p60, %p61
    %s63 = ssub.s32 %s8, %s15
    %p64 = scmp.eq.s32.totalorder %s63, 0
    %s66 = sadd.s32 %s65, 1
    %s67 = scalar_select %p64, %s65, %s66
    %p70 = pneg %p64
    %p71 = scmp.eq.s32.totalorder %s8, 1
    %p72 = por %p70, %p71
    %p73 = scmp.ne.s32.totalorder %s65, %s68
    %p74 = scmp.eq.s32.totalorder %s8, 0
    %p75 = por %p73, %p74
    %p76 = scmp.ne.s32.totalorder %s65, %s68
    %p77 = scmp.eq.s32.totalorder %s13, 1
    %p78 = por %p76, %p77
    %p79 = scmp.ne.s32.totalorder %s68, %s69
    %p80 = scmp.eq.s32.totalorder %s13, 0
    %p81 = por %p79, %p80
    %p82 = scmp.ne.s32.totalorder %s68, %s69
    %p83 = scmp.eq.s32.totalorder %s14, 1
    %p84 = por %p82, %p83
    %p86 = scmp.ne.s32.totalorder %s69, %s85
    %p87 = scmp.eq.s32.totalorder %s14, 0
    %p88 = por %p86, %p87
    %p89 = scmp.le.s32.totalorder 1, %s8
    %p90 = scmp.lt.s32.totalorder %s8, 3
    %p91 = pnand %p89, %p90
    %p92 = pneg %p91
    // Predicated region
    $region9: #{geometric_attention_forward.5} parent=5 // pred_check
      _
    $region10: #{geometric_attention_forward.5} parent=5 // pred_check_branch
      %94 = sbr.rel (%p91) target = $region12
    $region11: #{geometric_attention_forward.5} parent=5 // pred_region
      %s95 = ssub.s32 %s8, 1
      // Predicated region
      $region13: #{geometric_attention_forward.5} parent=11 // pred_check
        %p96 = pneg %p55
      $region14: #{geometric_attention_forward.5} parent=11 // pred_check_branch
        %98 = sbr.rel (%p96) target = $region16
      $region15: #{geometric_attention_forward.5} parent=11 // pred_region
        _
      $region16: #{geometric_attention_forward.5} parent=11 // pred_fallthru
        _
    $region12: #{geometric_attention_forward.5} parent=5 // pred_fallthru
      _
    %p99 = scmp.lt.s32.totalorder %s8, 2
    // Predicated region
    $region17: #{geometric_attention_forward.5} parent=5 // pred_check
      %p100 = pneg %p99
    $region18: #{geometric_attention_forward.5} parent=5 // pred_check_branch
      %102 = sbr.rel (%p100) target = $region20
    $region19: #{geometric_attention_forward.5} parent=5 // pred_region
      // Predicated region
      $region21: #{geometric_attention_forward.5} parent=19 // pred_check
        %p103 = pneg %p28
      $region22: #{geometric_attention_forward.5} parent=19 // pred_check_branch
        %105 = sbr.rel (%p103) target = $region24
      $region23: #{geometric_attention_forward.5} parent=19 // pred_region
        %p106 = scmp.lt.s32.totalorder %s8, 1
        %s107 = scalar_select %p106, %s8, 1
        %s108 = smul.addr %s107, 2
        %s109 = smul.addr %s108, 4
        %s110 = scalar_lea.vmem %s0, %s109
      $region24: #{geometric_attention_forward.5} parent=19 // pred_fallthru
        _
    $region20: #{geometric_attention_forward.5} parent=5 // pred_fallthru
      _
    %p111 = scmp.le.s32.totalorder 1, %s8
    %p112 = scmp.lt.s32.totalorder %s8, 3
    %p113 = pnand %p111, %p112
    %p114 = pneg %p113
    // Predicated region
    $region25: #{geometric_attention_forward.5} parent=5 // pred_check
      _
    $region26: #{geometric_attention_forward.5} parent=5 // pred_check_branch
      %116 = sbr.rel (%p113) target = $region28
    $region27: #{geometric_attention_forward.5} parent=5 // pred_region
      %s117 = ssub.s32 %s8, 1
      %p118 = scmp.lt.s32.totalorder %s13, 1
      %s119 = scalar_select %p118, %s13, 1
      %s120 = smul.addr %s119, 2
      %s121 = smul.addr %s120, 4
      %s122 = scalar_lea.vmem %s0, %s121
      %p123 = pneg %p34
      %p124 = pneg %p31
      %p125 = pneg %p55
      %p126 = pneg %p52
      %p127 = pneg %p81
      %p128 = pneg %p78
      %p129 = scmp.lt.s32.totalorder %s13, 1
      %s130 = scalar_select %p129, %s13, 1
      %s131 = smul.addr %s130, 8
      %s132 = scalar_lea.vmem %s2, %s131
      %p133 = scmp.lt.s32.totalorder %s13, 1
      %s134 = scalar_select %p133, %s13, 1
      %s135 = smul.addr %s134, 2
      %s136 = smul.addr %s135, 4
      %s137 = scalar_lea.vmem %s0, %s136
      %p138 = scmp.lt.s32.totalorder %s13, 1
      %s139 = scalar_select %p138, %s13, 1
      %s140 = smul.addr %s139, 8
      %s141 = scalar_lea.vmem %s2, %s140
      %v143 = vld [vmem:[%s137] sm:$0xff]
      %v144 = vld [vmem:[%s1] sm:$0xf]
      %v145 = vld [vmem:[%s1 + $0x4] sm:$0xf]
      %v146 = vld [vmem:[%s1 + $0x8] sm:$0xf]
      %v147 = vld [vmem:[%s1 + $0xc] sm:$0xf]
      %v148 = vld [vmem:[%s1 + $0x10] sm:$0xf]
      %v149 = vld [vmem:[%s1 + $0x14] sm:$0xf]
      %v150 = vld [vmem:[%s1 + $0x18] sm:$0xf]
      %v151 = vld [vmem:[%s1 + $0x1c] sm:$0xf]
      %v152 = vld [vmem:[%s1 + $0x20] sm:$0xf]
      %v153 = vld [vmem:[%s1 + $0x24] sm:$0xf]
      %v154 = vld [vmem:[%s1 + $0x28] sm:$0xf]
      %v155 = vld [vmem:[%s1 + $0x2c] sm:$0xf]
      %v156 = vld [vmem:[%s1 + $0x30] sm:$0xf]
      %v157 = vld [vmem:[%s1 + $0x34] sm:$0xf]
      %v158 = vld [vmem:[%s1 + $0x38] sm:$0xf]
      %v159 = vld [vmem:[%s1 + $0x3c] sm:$0xf]
      %v160 = vld [vmem:[%s1 + $0x40] sm:$0xf]
      %v161 = vld [vmem:[%s1 + $0x44] sm:$0xf]
      %v162 = vld [vmem:[%s1 + $0x48] sm:$0xf]
      %v163 = vld [vmem:[%s1 + $0x4c] sm:$0xf]
      %v164 = vld [vmem:[%s1 + $0x50] sm:$0xf]
      %v165 = vld [vmem:[%s1 + $0x54] sm:$0xf]
      %v166 = vld [vmem:[%s1 + $0x58] sm:$0xf]
      %v167 = vld [vmem:[%s1 + $0x5c] sm:$0xf]
      %v168 = vld [vmem:[%s1 + $0x60] sm:$0xf]
      %v169 = vld [vmem:[%s1 + $0x64] sm:$0xf]
      %v170 = vld [vmem:[%s1 + $0x68] sm:$0xf]
      %v171 = vld [vmem:[%s1 + $0x6c] sm:$0xf]
      %v172 = vld [vmem:[%s1 + $0x70] sm:$0xf]
      %v173 = vld [vmem:[%s1 + $0x74] sm:$0xf]
      %v174 = vld [vmem:[%s1 + $0x78] sm:$0xf]
      %v175 = vld [vmem:[%s1 + $0x7c] sm:$0xf]
      %v177 = vunpack.c.l.b16 %v143
      %v178 = vunpack.c.h.b16 %v143
      %v179 = vpack.c.b16 %v177, %v177
      %v180 = vpack.c.b16 %v178, %v178
      %v215 = vunpack.c.l.b16 %v144
      %v216 = vunpack.c.l.b16 %v145
      %v217 = vunpack.c.l.b16 %v146
      %v218 = vunpack.c.l.b16 %v147
      %v219 = vunpack.c.l.b16 %v148
      %v220 = vunpack.c.l.b16 %v149
      %v221 = vunpack.c.l.b16 %v150
      %v222 = vunpack.c.l.b16 %v151
      %v223 = vunpack.c.l.b16 %v152
      %v224 = vunpack.c.l.b16 %v153
      %v225 = vunpack.c.l.b16 %v154
      %v226 = vunpack.c.l.b16 %v155
      %v227 = vunpack.c.l.b16 %v156
      %v228 = vunpack.c.l.b16 %v157
      %v229 = vunpack.c.l.b16 %v158
      %v230 = vunpack.c.l.b16 %v159
      %v231 = vunpack.c.l.b16 %v160
      %v232 = vunpack.c.l.b16 %v161
      %v233 = vunpack.c.l.b16 %v162
      %v234 = vunpack.c.l.b16 %v163
      %v235 = vunpack.c.l.b16 %v164
      %v236 = vunpack.c.l.b16 %v165
      %v237 = vunpack.c.l.b16 %v166
      %v238 = vunpack.c.l.b16 %v167
      %v239 = vunpack.c.l.b16 %v168
      %v240 = vunpack.c.l.b16 %v169
      %v241 = vunpack.c.l.b16 %v170
      %v242 = vunpack.c.l.b16 %v171
      %v243 = vunpack.c.l.b16 %v172
      %v244 = vunpack.c.l.b16 %v173
      %v245 = vunpack.c.l.b16 %v174
      %v246 = vunpack.c.l.b16 %v175
      %v247 = vpack.c.b16 %v216, %v215
      %v248 = vpack.c.b16 %v218, %v217
      %v249 = vpack.c.b16 %v220, %v219
      %v250 = vpack.c.b16 %v222, %v221
      %v251 = vpack.c.b16 %v224, %v223
      %v252 = vpack.c.b16 %v226, %v225
      %v253 = vpack.c.b16 %v228, %v227
      %v254 = vpack.c.b16 %v230, %v229
      %v255 = vpack.c.b16 %v232, %v231
      %v256 = vpack.c.b16 %v234, %v233
      %v257 = vpack.c.b16 %v236, %v235
      %v258 = vpack.c.b16 %v238, %v237
      %v259 = vpack.c.b16 %v240, %v239
      %v260 = vpack.c.b16 %v242, %v241
      %v261 = vpack.c.b16 %v244, %v243
      %v262 = vpack.c.b16 %v246, %v245
      %279 = vmatprep.subr.bf16.mxu0 0
      %280 = vmatpush1.bf16.msra.mxu0 %v247
      %281 = vmatprep.subr.bf16.mxu0 0
      %282 = vmatpush1.bf16.msra.mxu0 %v248
      %283 = vmatprep.subr.bf16.mxu0 0
      %284 = vmatpush1.bf16.msra.mxu0 %v249
      %285 = vmatprep.subr.bf16.mxu0 0
      %286 = vmatpush1.bf16.msra.mxu0 %v250
      %287 = vmatprep.subr.bf16.mxu0 0
      %288 = vmatpush1.bf16.msra.mxu0 %v251
      %289 = vmatprep.subr.bf16.mxu0 0
      %290 = vmatpush1.bf16.msra.mxu0 %v252
      %291 = vmatprep.subr.bf16.mxu0 0
      %292 = vmatpush1.bf16.msra.mxu0 %v253
      %293 = vmatprep.subr.bf16.mxu0 0
      %294 = vmatpush1.bf16.msra.mxu0 %v254
      %295 = vmatprep.subr.bf16.mxu0 0
      %296 = vmatpush1.bf16.msra.mxu0 %v255
      %297 = vmatprep.subr.bf16.mxu0 0
      %298 = vmatpush1.bf16.msra.mxu0 %v256
      %299 = vmatprep.subr.bf16.mxu0 0
      %300 = vmatpush1.bf16.msra.mxu0 %v257
      %301 = vmatprep.subr.bf16.mxu0 0
      %302 = vmatpush1.bf16.msra.mxu0 %v258
      %303 = vmatprep.subr.bf16.mxu0 0
      %304 = vmatpush1.bf16.msra.mxu0 %v259
      %305 = vmatprep.subr.bf16.mxu0 0
      %306 = vmatpush1.bf16.msra.mxu0 %v260
      %307 = vmatprep.subr.bf16.mxu0 0
      %308 = vmatpush1.bf16.msra.mxu0 %v261
      %309 = vmatprep.subr.bf16.mxu0 0
      %310 = vmatpush1.bf16.msra.mxu0 %v262
      %311 = vmatprep.mubr.bf16.mxu0 %v180
      %312 = vmatmul.mubr.bf16.gmra.mrb[0].mxu0 %v179
      %v313 = vpop.f32.mrb[0].mxu0
      %v314 = vadd.f32 0.0, %v313
      %v315 = vpop.f32.mrb[0].mxu0
      %v316 = vpop.f32.mrb[0].mxu0
      %v317 = vpop.f32.mrb[0].mxu0
      %318 = vdwg.mxu0
      %319 = vst [vmem:[%s141] sm:$0xff] %v314
      %p320 = scmp.lt.s32.totalorder %s13, 1
      %s321 = scalar_select %p320, %s13, 1
      %s322 = smul.addr %s321, 8
      %s323 = scalar_lea.vmem %s2, %s322
      // Predicated region
      $region29: #{geometric_attention_forward.5} parent=27 // pred_check
        %p324 = pneg %p78
      $region30: #{geometric_attention_forward.5} parent=27 // pred_check_branch
        %326 = sbr.rel (%p324) target = $region32
      $region31: #{geometric_attention_forward.5} parent=27 // pred_region
        _
      $region32: #{geometric_attention_forward.5} parent=27 // pred_fallthru
        _
    $region28: #{geometric_attention_forward.5} parent=5 // pred_fallthru
      _
    %p327 = scmp.le.s32.totalorder 2, %s8
    // Predicated region
    $region33: #{geometric_attention_forward.5} parent=5 // pred_check
      %p328 = pneg %p327
    $region34: #{geometric_attention_forward.5} parent=5 // pred_check_branch
      %330 = sbr.rel (%p328) target = $region36
    $region35: #{geometric_attention_forward.5} parent=5 // pred_region
      %s331 = ssub.s32 %s8, 2
      // Predicated region
      $region37: #{geometric_attention_forward.5} parent=35 // pred_check
        %p332 = pneg %p84
      $region38: #{geometric_attention_forward.5} parent=35 // pred_check_branch
        %334 = sbr.rel (%p332) target = $region40
      $region39: #{geometric_attention_forward.5} parent=35 // pred_region
        %p335 = scmp.lt.s32.totalorder %s14, 1
        %s336 = scalar_select %p335, %s14, 1
        %s337 = smul.addr %s336, 8
        %s338 = scalar_lea.vmem %s2, %s337
      $region40: #{geometric_attention_forward.5} parent=35 // pred_fallthru
        _
    $region36: #{geometric_attention_forward.5} parent=5 // pred_fallthru
      _
  $region6: #{geometric_attention_forward.5} parent=0 // loop_footer
    %s12 = sadd.s32 1, %s8
  $region7: #{geometric_attention_forward.5} parent=0 // loop_footer_branch
    %7 = sbr.rel target = $region3
  $region8: #{geometric_attention_forward.5} parent=0 // loop_exit
    _

// kernel: geometric_attention_forward.4
$region0: #{geometric_attention_forward.4}
  #allocation0 [shape = 'u32[]', space=smem, size = 0x4, offset = 0x4, fixed_abs, tag = 'smem constant byte address 0x4 - core index']
  #allocation1 [shape = 'u32[144,128]{1,0:T(1,128)}', space=vmem, size = 0x12000, scoped, tag = 'internal scratch']
  #allocation2 [shape = 'f32[8,1]{1,0:T(8,128)}', space=vmem, size = 0x1000, scoped, tag = 'scratch operand']
  #allocation3 [shape = 'f32[8,1]{1,0:T(8,128)}', space=vmem, size = 0x1000, scoped, tag = 'scratch operand']
  #allocation4 [shape = 'f32[8,128]{1,0:T(8,128)}', space=vmem, size = 0x1000, scoped, tag = 'scratch operand']
  %s0 = inlined_call_operand.vmem [shape: bf16[2,8,256], index: 0, kind: input, shape index: {}]
  %s1 = inlined_call_operand.vmem [shape: bf16[2,8,128], index: 1, kind: input, shape index: {}]
  %s2 = inlined_call_operand.vmem [shape: bf16[2,8,128], index: 2, kind: input, shape index: {}]
  %s3 = inlined_call_operand.vmem [shape: bf16[2,8,256], index: 3, kind: output, shape index: {}]
  %s4 = sld [smem:[#allocation0]]
  $region53: #{geometric_attention_forward.4} parent=0
    _
  %s6 = ssub.s32 1, %s4
  %s7 = scalar_select 0, %s6, %s4
  loop: start=0, step=1, limit=6
  $region2: #{geometric_attention_forward.4} parent=0 // loop_pre_header
    _
  $region3: #{geometric_attention_forward.4} parent=0 // loop_header
    %s9 = sphi 0, %s13
    %p10 = scmp.ge.s32.totalorder %s9, 6
    %s16 = sphi 0, %s42
    %s17 = sphi 0, %s38
    %s18 = sphi 0, %s34
    %s19 = sphi 0, %s30
    %s20 = sphi 0, %s16
    %s21 = sphi 0, %s17
    %s22 = sphi 0, %s18
    %s23 = sphi 0, %s19
    %s24 = sphi 0, %s20
    %s25 = sphi 0, %s21
    %s26 = sphi 0, %s22
    %s27 = sphi 0, %s23
    %s49 = sphi 0, %s51
    %s52 = sphi 0, %s49
    %s53 = sphi 0, %s52
    %s69 = sphi 0, %s53
    %s77 = sphi 0, %s79
    %s80 = sphi 0, %s77
    %s81 = sphi 0, %s80
    %s97 = sphi 0, %s81
    %s105 = sphi 0, %s107
    %s108 = sphi 0, %s105
    %s109 = sphi 0, %s108
    %s125 = sphi 0, %s109
    %s135 = sphi 0, %s137
    %s138 = sphi 0, %s135
    %s139 = sphi 0, %s138
    %s155 = sphi 0, %s139
  $region4: #{geometric_attention_forward.4} parent=0 // loop_header_branch
    %12 = sbr.rel (%p10) target = $region8
  $region5: #{geometric_attention_forward.4} parent=0 // loop_body
    %s14 = ssub.s32 %s9, 1
    %s15 = ssub.s32 %s9, 2
    %s28 = sadd.s32 1, %s19
    %p29 = scmp.ge.s32.totalorder %s28, 1
    %s30 = scalar_select %p29, 0, %s28
    %s31 = sadd.s32 1, %s18
    %s32 = scalar_select %p29, %s31, %s18
    %p33 = scmp.ge.s32.totalorder %s32, 1
    %s34 = scalar_select %p33, 0, %s32
    %s35 = sadd.s32 1, %s17
    %s36 = scalar_select %p33, %s35, %s17
    %p37 = scmp.ge.s32.totalorder %s36, 2
    %s38 = scalar_select %p37, 0, %s36
    %s39 = sadd.s32 1, %s16
    %s40 = scalar_select %p37, %s39, %s16
    %p41 = scmp.ge.s32.totalorder %s40, 2
    %s42 = scalar_select %p41, 0, %s40
    %s43 = ssub.s32 %s16, %s42
    %s44 = ssub.s32 %s18, %s34
    %s45 = sor.u32 %s43, %s44
    %s46 = ssub.s32 %s17, %s38
    %s47 = sor.u32 %s45, %s46
    %p48 = scmp.eq.s32.totalorder %s47, 0
    %s50 = sadd.s32 %s49, 1
    %s51 = scalar_select %p48, %s49, %s50
    %p54 = pneg %p48
    %p55 = scmp.eq.s32.totalorder %s9, 3
    %p56 = por %p54, %p55
    %p57 = scmp.ne.s32.totalorder %s49, %s52
    %p58 = scmp.eq.s32.totalorder %s9, 0
    %p59 = por %p57, %p58
    %p60 = scmp.ne.s32.totalorder %s49, %s52
    %p61 = scmp.eq.s32.totalorder %s14, 3
    %p62 = por %p60, %p61
    %p63 = scmp.ne.s32.totalorder %s52, %s53
    %p64 = scmp.eq.s32.totalorder %s14, 0
    %p65 = por %p63, %p64
    %p66 = scmp.ne.s32.totalorder %s52, %s53
    %p67 = scmp.eq.s32.totalorder %s15, 3
    %p68 = por %p66, %p67
    %p70 = scmp.ne.s32.totalorder %s53, %s69
    %p71 = scmp.eq.s32.totalorder %s15, 0
    %p72 = por %p70, %p71
    %s73 = ssub.s32 %s16, %s42
    %s74 = ssub.s32 %s19, %s30
    %s75 = sor.u32 %s73, %s74
    %p76 = scmp.eq.s32.totalorder %s75, 0
    %s78 = sadd.s32 %s77, 1
    %s79 = scalar_select %p76, %s77, %s78
    %p82 = pneg %p76
    %p83 = scmp.eq.s32.totalorder %s9, 3
    %p84 = por %p82, %p83
    %p85 = scmp.ne.s32.totalorder %s77, %s80
    %p86 = scmp.eq.s32.totalorder %s9, 0
    %p87 = por %p85, %p86
    %p88 = scmp.ne.s32.totalorder %s77, %s80
    %p89 = scmp.eq.s32.totalorder %s14, 3
    %p90 = por %p88, %p89
    %p91 = scmp.ne.s32.totalorder %s80, %s81
    %p92 = scmp.eq.s32.totalorder %s14, 0
    %p93 = por %p91, %p92
    %p94 = scmp.ne.s32.totalorder %s80, %s81
    %p95 = scmp.eq.s32.totalorder %s15, 3
    %p96 = por %p94, %p95
    %p98 = scmp.ne.s32.totalorder %s81, %s97
    %p99 = scmp.eq.s32.totalorder %s15, 0
    %p100 = por %p98, %p99
    %s101 = ssub.s32 %s16, %s42
    %s102 = ssub.s32 %s19, %s30
    %s103 = sor.u32 %s101, %s102
    %p104 = scmp.eq.s32.totalorder %s103, 0
    %s106 = sadd.s32 %s105, 1
    %s107 = scalar_select %p104, %s105, %s106
    %p110 = pneg %p104
    %p111 = scmp.eq.s32.totalorder %s9, 3
    %p112 = por %p110, %p111
    %p113 = scmp.ne.s32.totalorder %s105, %s108
    %p114 = scmp.eq.s32.totalorder %s9, 0
    %p115 = por %p113, %p114
    %p116 = scmp.ne.s32.totalorder %s105, %s108
    %p117 = scmp.eq.s32.totalorder %s14, 3
    %p118 = por %p116, %p117
    %p119 = scmp.ne.s32.totalorder %s108, %s109
    %p120 = scmp.eq.s32.totalorder %s14, 0
    %p121 = por %p119, %p120
    %p122 = scmp.ne.s32.totalorder %s108, %s109
    %p123 = scmp.eq.s32.totalorder %s15, 3
    %p124 = por %p122, %p123
    %p126 = scmp.ne.s32.totalorder %s109, %s125
    %p127 = scmp.eq.s32.totalorder %s15, 0
    %p128 = por %p126, %p127
    %s129 = ssub.s32 %s16, %s42
    %s130 = ssub.s32 %s18, %s34
    %s131 = sor.u32 %s129, %s130
    %s132 = ssub.s32 %s17, %s38
    %s133 = sor.u32 %s131, %s132
    %p134 = scmp.eq.s32.totalorder %s133, 0
    %s136 = sadd.s32 %s135, 1
    %s137 = scalar_select %p134, %s135, %s136
    %p140 = pneg %p134
    %p141 = scmp.eq.s32.totalorder %s9, 3
    %p142 = por %p140, %p141
    %p143 = scmp.ne.s32.totalorder %s135, %s138
    %p144 = scmp.eq.s32.totalorder %s9, 0
    %p145 = por %p143, %p144
    %p146 = scmp.ne.s32.totalorder %s135, %s138
    %p147 = scmp.eq.s32.totalorder %s14, 3
    %p148 = por %p146, %p147
    %p149 = scmp.ne.s32.totalorder %s138, %s139
    %p150 = scmp.eq.s32.totalorder %s14, 0
    %p151 = por %p149, %p150
    %p152 = scmp.ne.s32.totalorder %s138, %s139
    %p153 = scmp.eq.s32.totalorder %s15, 3
    %p154 = por %p152, %p153
    %p156 = scmp.ne.s32.totalorder %s139, %s155
    %p157 = scmp.eq.s32.totalorder %s15, 0
    %p158 = por %p156, %p157
    %p159 = scmp.le.s32.totalorder 1, %s9
    %p160 = scmp.lt.s32.totalorder %s9, 5
    %p161 = pnand %p159, %p160
    %p162 = pneg %p161
    // Predicated region
    $region9: #{geometric_attention_forward.4} parent=5 // pred_check
      _
    $region10: #{geometric_attention_forward.4} parent=5 // pred_check_branch
      %164 = sbr.rel (%p161) target = $region12
    $region11: #{geometric_attention_forward.4} parent=5 // pred_region
      %s165 = ssub.s32 %s9, 1
    $region12: #{geometric_attention_forward.4} parent=5 // pred_fallthru
      _
    %p166 = scmp.lt.s32.totalorder %s9, 4
    // Predicated region
    $region13: #{geometric_attention_forward.4} parent=5 // pred_check
      %p167 = pneg %p166
    $region14: #{geometric_attention_forward.4} parent=5 // pred_check_branch
      %169 = sbr.rel (%p167) target = $region16
    $region15: #{geometric_attention_forward.4} parent=5 // pred_region
      // Predicated region
      $region17: #{geometric_attention_forward.4} parent=15 // pred_check
        %p170 = pneg %p59
      $region18: #{geometric_attention_forward.4} parent=15 // pred_check_branch
        %172 = sbr.rel (%p170) target = $region20
      $region19: #{geometric_attention_forward.4} parent=15 // pred_region
        %p173 = scmp.lt.s32.totalorder %s16, 1
        %s174 = scalar_select %p173, %s16, 1
        %p175 = scmp.lt.s32.totalorder %s18, 0
        %s176 = scalar_select %p175, %s18, 0
        %p177 = scmp.lt.s32.totalorder %s17, 1
        %s178 = scalar_select %p177, %s17, 1
        %s179 = smul.addr %s176, 2
        %s180 = sadd.s32 %s178, %s179
        %s181 = smul.addr %s174, 2
        %s182 = sadd.s32 %s180, %s181
        %s183 = smul.addr %s182, 4
        %s184 = scalar_lea.vmem %s0, %s183
      $region20: #{geometric_attention_forward.4} parent=15 // pred_fallthru
        _
      // Predicated region
      $region21: #{geometric_attention_forward.4} parent=15 // pred_check
        %p185 = pneg %p87
      $region22: #{geometric_attention_forward.4} parent=15 // pred_check_branch
        %187 = sbr.rel (%p185) target = $region24
      $region23: #{geometric_attention_forward.4} parent=15 // pred_region
        %p188 = scmp.lt.s32.totalorder %s16, 1
        %s189 = scalar_select %p188, %s16, 1
        %p190 = scmp.lt.s32.totalorder %s19, 0
        %s191 = scalar_select %p190, %s19, 0
        %s192 = sadd.s32 %s191, %s189
        %s193 = smul.addr %s192, 4
        %s194 = scalar_lea.vmem %s1, %s193
      $region24: #{geometric_attention_forward.4} parent=15 // pred_fallthru
        _
      // Predicated region
      $region25: #{geometric_attention_forward.4} parent=15 // pred_check
        %p195 = pneg %p115
      $region26: #{geometric_attention_forward.4} parent=15 // pred_check_branch
        %197 = sbr.rel (%p195) target = $region28
      $region27: #{geometric_attention_forward.4} parent=15 // pred_region
        %p198 = scmp.lt.s32.totalorder %s16, 1
        %s199 = scalar_select %p198, %s16, 1
        %p200 = scmp.lt.s32.totalorder %s19, 0
        %s201 = scalar_select %p200, %s19, 0
        %s202 = sadd.s32 %s201, %s199
        %s203 = smul.addr %s202, 4
        %s204 = scalar_lea.vmem %s2, %s203
      $region28: #{geometric_attention_forward.4} parent=15 // pred_fallthru
        _
    $region16: #{geometric_attention_forward.4} parent=5 // pred_fallthru
      _
    %p205 = scmp.le.s32.totalorder 1, %s9
    %p206 = scmp.lt.s32.totalorder %s9, 5
    %p207 = pnand %p205, %p206
    %p208 = pneg %p207
    // Predicated region
    $region29: #{geometric_attention_forward.4} parent=5 // pred_check
      _
    $region30: #{geometric_attention_forward.4} parent=5 // pred_check_branch
      %210 = sbr.rel (%p207) target = $region32
    $region31: #{geometric_attention_forward.4} parent=5 // pred_region
      %s211 = ssub.s32 %s9, 1
      %p212 = scmp.lt.s32.totalorder %s20, 1
      %s213 = scalar_select %p212, %s20, 1
      %p214 = scmp.lt.s32.totalorder %s22, 0
      %s215 = scalar_select %p214, %s22, 0
      %p216 = scmp.lt.s32.totalorder %s21, 1
      %s217 = scalar_select %p216, %s21, 1
      %s218 = smul.addr %s215, 2
      %s219 = sadd.s32 %s217, %s218
      %s220 = smul.addr %s213, 2
      %s221 = sadd.s32 %s219, %s220
      %s222 = smul.addr %s221, 4
      %s223 = scalar_lea.vmem %s0, %s222
      %p224 = pneg %p65
      %p225 = pneg %p62
      %p226 = scmp.lt.s32.totalorder %s20, 1
      %s227 = scalar_select %p226, %s20, 1
      %p228 = scmp.lt.s32.totalorder %s23, 0
      %s229 = scalar_select %p228, %s23, 0
      %s230 = sadd.s32 %s229, %s227
      %s231 = smul.addr %s230, 4
      %s232 = scalar_lea.vmem %s1, %s231
      %p233 = pneg %p93
      %p234 = pneg %p90
      %p235 = scmp.lt.s32.totalorder %s20, 1
      %s236 = scalar_select %p235, %s20, 1
      %p237 = scmp.lt.s32.totalorder %s23, 0
      %s238 = scalar_select %p237, %s23, 0
      %s239 = sadd.s32 %s238, %s236
      %s240 = smul.addr %s239, 4
      %s241 = scalar_lea.vmem %s2, %s240
      %p242 = pneg %p121
      %p243 = pneg %p118
      %p244 = pneg %p151
      %p245 = pneg %p148
      %p246 = scmp.lt.s32.totalorder %s20, 1
      %s247 = scalar_select %p246, %s20, 1
      %p248 = scmp.lt.s32.totalorder %s22, 0
      %s249 = scalar_select %p248, %s22, 0
      %p250 = scmp.lt.s32.totalorder %s21, 1
      %s251 = scalar_select %p250, %s21, 1
      %s252 = smul.addr %s249, 2
      %s253 = sadd.s32 %s251, %s252
      %s254 = smul.addr %s247, 2
      %s255 = sadd.s32 %s253, %s254
      %s256 = smul.addr %s255, 4
      %s257 = scalar_lea.vmem %s3, %s256
      %p258 = scmp.lt.s32.totalorder %s20, 1
      %s259 = scalar_select %p258, %s20, 1
      %p260 = scmp.lt.s32.totalorder %s22, 0
      %s261 = scalar_select %p260, %s22, 0
      %p262 = scmp.lt.s32.totalorder %s21, 1
      %s263 = scalar_select %p262, %s21, 1
      %s264 = smul.addr %s261, 2
      %s265 = sadd.s32 %s263, %s264
      %s266 = smul.addr %s259, 2
      %s267 = sadd.s32 %s265, %s266
      %s268 = smul.addr %s267, 4
      %s269 = scalar_lea.vmem %s0, %s268
      %p270 = scmp.lt.s32.totalorder %s20, 1
      %s271 = scalar_select %p270, %s20, 1
      %p272 = scmp.lt.s32.totalorder %s23, 0
      %s273 = scalar_select %p272, %s23, 0
      %s274 = sadd.s32 %s273, %s271
      %s275 = smul.addr %s274, 4
      %s276 = scalar_lea.vmem %s1, %s275
      %p277 = scmp.lt.s32.totalorder %s20, 1
      %s278 = scalar_select %p277, %s20, 1
      %p279 = scmp.lt.s32.totalorder %s23, 0
      %s280 = scalar_select %p279, %s23, 0
      %s281 = sadd.s32 %s280, %s278
      %s282 = smul.addr %s281, 4
      %s283 = scalar_lea.vmem %s2, %s282
      %p284 = scmp.lt.s32.totalorder %s20, 1
      %s285 = scalar_select %p284, %s20, 1
      %p286 = scmp.lt.s32.totalorder %s22, 0
      %s287 = scalar_select %p286, %s22, 0
      %p288 = scmp.lt.s32.totalorder %s21, 1
      %s289 = scalar_select %p288, %s21, 1
      %s290 = smul.addr %s287, 2
      %s291 = sadd.s32 %s289, %s290
      %s292 = smul.addr %s285, 2
      %s293 = sadd.s32 %s291, %s292
      %s294 = smul.addr %s293, 4
      %s295 = scalar_lea.vmem %s3, %s294
      %p297 = scmp.eq.s32.totalorder %s23, 0
      // Predicated region
      $region33: #{geometric_attention_forward.4} parent=31 // pred_check
        %p298 = pneg %p297
      $region34: #{geometric_attention_forward.4} parent=31 // pred_check_branch
        %300 = sbr.rel (%p298) target = $region36
      $region35: #{geometric_attention_forward.4} parent=31 // pred_region
        %vm301 = vcmask 7168
        %302 = vst.msk [vmem:[#allocation2] sm:$0xff] %vm301, -inf
        %303 = vst.msk [vmem:[#allocation3] sm:$0xff] %vm301, 0.0
        %304 = vst [vmem:[#allocation4] sm:$0xff] 0.0
      $region36: #{geometric_attention_forward.4} parent=31 // pred_fallthru
        _
      %v305 = vld [vmem:[%s269] sm:$0xf]
      %v306 = vld [vmem:[%s276] sm:$0xf]
      %307 = vmatprep.subr.bf16.mxu0 0
      %308 = vmatpush1.bf16.xpose.msra.mxu0 %v306
      %309 = vmatprep.subr.bf16.mxu0 0
      %310 = vmatpush1.bf16.xpose.msra.mxu0 0
      %311 = vmatprep.subr.bf16.mxu0 0
      %312 = vmatpush1.bf16.xpose.msra.mxu0 0
      %313 = vmatprep.subr.bf16.mxu0 0
      %314 = vmatpush1.bf16.xpose.msra.mxu0 0
      %315 = vmatprep.subr.bf16.mxu0 0
      %316 = vmatpush1.bf16.xpose.msra.mxu0 0
      %317 = vmatprep.subr.bf16.mxu0 0
      %318 = vmatpush1.bf16.xpose.msra.mxu0 0
      %319 = vmatprep.subr.bf16.mxu0 0
      %320 = vmatpush1.bf16.xpose.msra.mxu0 0
      %321 = vmatprep.subr.bf16.mxu0 0
      %322 = vmatpush1.bf16.xpose.msra.mxu0 0
      %323 = vmatprep.subr.bf16.mxu0 0
      %324 = vmatpush1.bf16.xpose.msra.mxu0 0
      %325 = vmatprep.subr.bf16.mxu0 0
      %326 = vmatpush1.bf16.xpose.msra.mxu0 0
      %327 = vmatprep.subr.bf16.mxu0 0
      %328 = vmatpush1.bf16.xpose.msra.mxu0 0
      %329 = vmatprep.subr.bf16.mxu0 0
      %330 = vmatpush1.bf16.xpose.msra.mxu0 0
      %331 = vmatprep.subr.bf16.mxu0 0
      %332 = vmatpush1.bf16.xpose.msra.mxu0 0
      %333 = vmatprep.subr.bf16.mxu0 0
      %334 = vmatpush1.bf16.xpose.msra.mxu0 0
      %335 = vmatprep.subr.bf16.mxu0 0
      %336 = vmatpush1.bf16.xpose.msra.mxu0 0
      %337 = vmatprep.subr.bf16.mxu0 0
      %338 = vmatpush1.bf16.xpose.msra.mxu0 0
      %339 = vmatprep.mubr.bf16.mxu0 0
      %340 = vmatmul.mubr.bf16.gmra.mrb[0].mxu0 %v305
      %v341 = vpop.f32.mrb[0].mxu0
      %v342 = vadd.f32 0.0, %v341
      %v343 = vpop.f32.mrb[0].mxu0
      %v344 = vpop.f32.mrb[0].mxu0
      %v345 = vpop.f32.mrb[0].mxu0
      %346 = vdwg.mxu0
      %v347 = vld [vmem:[#allocation2] sm:$0xff]
      %vm348 = vcmask 64512
      %v349 = vsel %vm348, %v342, -inf
      %350 = vmax.xlane.f32.xlu0 %v349
      %v351 = vpop.xlane.xlu0 %350
      %v352 = vmax.f32 %v347, %v351
      %v353 = vsub.f32 %v347, %v352
      %v354 = vmul.f32 %v353, 1.442695
      %v355 = vpow.pop %v354
      %357 = vset.pattern.permute.xlu0 0
      %358 = vperm.xlu0 %357, %v352
      %v359 = vpop.permute.xlu0 %358
      %v361 = vsub.f32 %v342, %v359
      %v362 = vmul.f32 %v361, 1.442695
      %v363 = vpow.pop %v362
      %v364 = vld [vmem:[#allocation3] sm:$0xff]
      %v365 = vmul.f32 %v355, %v364
      %v366 = vsel %vm348, %v363, 0.0
      %367 = vadd.xlane.f32.xlu0 %v366
      %v368 = vpop.xlane.xlu0 %367
      %v369 = vadd.f32 %v365, %v368
      %vm370 = vcmask 7168
      %371 = vst.msk [vmem:[#allocation3] sm:$0xff] %vm370, %v369
      %v372 = vld [vmem:[#allocation4] sm:$0xff]
      %374 = vset.pattern.permute.xlu0 0
      %375 = vperm.xlu0 %374, %v355
      %v376 = vpop.permute.xlu0 %375
      %v378 = vmul.f32 %v376, %v372
      %v379 = vpack.c.bf16 %v363, %v363
      %v380 = vld [vmem:[%s283] sm:$0xf]
      %v382 = vsel %vm348, %v379, 0
      %vm384 = vcmask 1043456
      %v386 = vsel %vm384, %v380, 0
      %388 = vmatprep.subr.bf16.mxu0 0
      %389 = vmatpush1.bf16.msra.mxu0 %v386
      %390 = vmatprep.subr.bf16.mxu0 0
      %391 = vmatpush1.bf16.msra.mxu0 0
      %392 = vmatprep.subr.bf16.mxu0 0
      %393 = vmatpush1.bf16.msra.mxu0 0
      %394 = vmatprep.subr.bf16.mxu0 0
      %395 = vmatpush1.bf16.msra.mxu0 0
      %396 = vmatprep.subr.bf16.mxu0 0
      %397 = vmatpush1.bf16.msra.mxu0 0
      %398 = vmatprep.subr.bf16.mxu0 0
      %399 = vmatpush1.bf16.msra.mxu0 0
      %400 = vmatprep.subr.bf16.mxu0 0
      %401 = vmatpush1.bf16.msra.mxu0 0
      %402 = vmatprep.subr.bf16.mxu0 0
      %403 = vmatpush1.bf16.msra.mxu0 0
      %404 = vmatprep.subr.bf16.mxu0 0
      %405 = vmatpush1.bf16.msra.mxu0 0
      %406 = vmatprep.subr.bf16.mxu0 0
      %407 = vmatpush1.bf16.msra.mxu0 0
      %408 = vmatprep.subr.bf16.mxu0 0
      %409 = vmatpush1.bf16.msra.mxu0 0
      %410 = vmatprep.subr.bf16.mxu0 0
      %411 = vmatpush1.bf16.msra.mxu0 0
      %412 = vmatprep.subr.bf16.mxu0 0
      %413 = vmatpush1.bf16.msra.mxu0 0
      %414 = vmatprep.subr.bf16.mxu0 0
      %415 = vmatpush1.bf16.msra.mxu0 0
      %416 = vmatprep.subr.bf16.mxu0 0
      %417 = vmatpush1.bf16.msra.mxu0 0
      %418 = vmatprep.subr.bf16.mxu0 0
      %419 = vmatpush1.bf16.msra.mxu0 0
      %420 = vmatprep.mubr.bf16.mxu0 0
      %421 = vmatmul.mubr.bf16.gmra.mrb[0].mxu0 %v382
      %v422 = vpop.f32.mrb[0].mxu0
      %v423 = vadd.f32 0.0, %v422
      %v424 = vpop.f32.mrb[0].mxu0
      %v425 = vpop.f32.mrb[0].mxu0
      %v426 = vpop.f32.mrb[0].mxu0
      %427 = vdwg.mxu0
      %v428 = vadd.f32 %v378, %v423
      %429 = vst [vmem:[#allocation4] sm:$0xff] %v428
      %430 = vst.msk [vmem:[#allocation2] sm:$0xff] %vm370, %v352
      // Predicated region
      $region37: #{geometric_attention_forward.4} parent=31 // pred_check
        %p431 = pneg %p297
      $region38: #{geometric_attention_forward.4} parent=31 // pred_check_branch
        %433 = sbr.rel (%p431) target = $region40
      $region39: #{geometric_attention_forward.4} parent=31 // pred_region
        %v434 = vld [vmem:[#allocation3] sm:$0xff]
        %v435 = vrcp.pop %v434
        %v436 = vld [vmem:[#allocation4] sm:$0xff]
        %438 = vset.pattern.permute.xlu0 0
        %439 = vperm.xlu0 %438, %v435
        %v440 = vpop.permute.xlu0 %439
        %v442 = vmul.f32 %v436, %v440
        %v443 = vpack.c.bf16 %v442, %v442
        %444 = vst [vmem:[%s295] sm:$0xf] %v443
      $region40: #{geometric_attention_forward.4} parent=31 // pred_fallthru
        _
      %p445 = scmp.lt.s32.totalorder %s20, 1
      %s446 = scalar_select %p445, %s20, 1
      %p447 = scmp.lt.s32.totalorder %s22, 0
      %s448 = scalar_select %p447, %s22, 0
      %p449 = scmp.lt.s32.totalorder %s21, 1
      %s450 = scalar_select %p449, %s21, 1
      %s451 = smul.addr %s448, 2
      %s452 = sadd.s32 %s450, %s451
      %s453 = smul.addr %s446, 2
      %s454 = sadd.s32 %s452, %s453
      %s455 = smul.addr %s454, 4
      %s456 = scalar_lea.vmem %s3, %s455
      // Predicated region
      $region41: #{geometric_attention_forward.4} parent=31 // pred_check
        %p457 = pneg %p148
      $region42: #{geometric_attention_forward.4} parent=31 // pred_check_branch
        %459 = sbr.rel (%p457) target = $region44
      $region43: #{geometric_attention_forward.4} parent=31 // pred_region
        _
      $region44: #{geometric_attention_forward.4} parent=31 // pred_fallthru
        _
    $region32: #{geometric_attention_forward.4} parent=5 // pred_fallthru
      _
    %p460 = scmp.le.s32.totalorder 2, %s9
    // Predicated region
    $region45: #{geometric_attention_forward.4} parent=5 // pred_check
      %p461 = pneg %p460
    $region46: #{geometric_attention_forward.4} parent=5 // pred_check_branch
      %463 = sbr.rel (%p461) target = $region48
    $region47: #{geometric_attention_forward.4} parent=5 // pred_region
      %s464 = ssub.s32 %s9, 2
      // Predicated region
      $region49: #{geometric_attention_forward.4} parent=47 // pred_check
        %p465 = pneg %p154
      $region50: #{geometric_attention_forward.4} parent=47 // pred_check_branch
        %467 = sbr.rel (%p465) target = $region52
      $region51: #{geometric_attention_forward.4} parent=47 // pred_region
        %p468 = scmp.lt.s32.totalorder %s24, 1
        %s469 = scalar_select %p468, %s24, 1
        %p470 = scmp.lt.s32.totalorder %s26, 0
        %s471 = scalar_select %p470, %s26, 0
        %p472 = scmp.lt.s32.totalorder %s25, 1
        %s473 = scalar_select %p472, %s25, 1
        %s474 = smul.addr %s471, 2
        %s475 = sadd.s32 %s473, %s474
        %s476 = smul.addr %s469, 2
        %s477 = sadd.s32 %s475, %s476
        %s478 = smul.addr %s477, 4
        %s479 = scalar_lea.vmem %s3, %s478
      $region52: #{geometric_attention_forward.4} parent=47 // pred_fallthru
        _
    $region48: #{geometric_attention_forward.4} parent=5 // pred_fallthru
      _
  $region6: #{geometric_attention_forward.4} parent=0 // loop_footer
    %s13 = sadd.s32 1, %s9
  $region7: #{geometric_attention_forward.4} parent=0 // loop_footer_branch
    %8 = sbr.rel target = $region3
  $region8: #{geometric_attention_forward.4} parent=0 // loop_exit
    _

// kernel: geometric_attention_forward.3
$region0: #{geometric_attention_forward.3}
  #allocation0 [shape = 'u32[]', space=smem, size = 0x4, offset = 0x4, fixed_abs, tag = 'smem constant byte address 0x4 - core index']
  #allocation1 [shape = 'u32[144,128]{1,0:T(1,128)}', space=vmem, size = 0x12000, scoped, tag = 'internal scratch']
  %s0 = inlined_call_operand.vmem [shape: bf16[16,64], index: 0, kind: input, shape index: {}]
  %s1 = inlined_call_operand.vmem [shape: bf16[64,256], index: 1, kind: input, shape index: {}]
  %s2 = inlined_call_operand.vmem [shape: bf16[64,128], index: 2, kind: input, shape index: {}]
  %s3 = inlined_call_operand.vmem [shape: bf16[64,128], index: 3, kind: input, shape index: {}]
  %s4 = inlined_call_operand.vmem [shape: bf16[16,256], index: 4, kind: output, shape index: {0}]
  %s5 = inlined_call_operand.vmem [shape: bf16[16,128], index: 5, kind: output, shape index: {1}]
  %s6 = inlined_call_operand.vmem [shape: bf16[16,128], index: 6, kind: output, shape index: {2}]
  %7 = xla_tuple %s4, %s5, %s6
  %s8 = sld [smem:[#allocation0]]
  $region65: #{geometric_attention_forward.3} parent=0
    _
  %s10 = ssub.s32 1, %s8
  %s11 = scalar_select 0, %s10, %s8
  loop: start=0, step=1, limit=4
  $region2: #{geometric_attention_forward.3} parent=0 // loop_pre_header
    _
  $region3: #{geometric_attention_forward.3} parent=0 // loop_header
    %s13 = sphi 0, %s17
    %p14 = scmp.ge.s32.totalorder %s13, 4
    %s23 = sphi 0, %s25
    %s26 = sphi 0, %s23
    %s27 = sphi 0, %s26
    %s43 = sphi 0, %s27
    %s47 = sphi 0, %s47
    %s49 = sphi 0, %s47
    %s50 = sphi 0, %s49
    %s64 = sphi 0, %s50
    %s68 = sphi 0, %s68
    %s70 = sphi 0, %s68
    %s71 = sphi 0, %s70
    %s85 = sphi 0, %s71
    %s89 = sphi 0, %s89
    %s91 = sphi 0, %s89
    %s92 = sphi 0, %s91
    %s106 = sphi 0, %s92
    %s112 = sphi 0, %s114
    %s115 = sphi 0, %s112
    %s116 = sphi 0, %s115
    %s132 = sphi 0, %s116
    %s138 = sphi 0, %s140
    %s141 = sphi 0, %s138
    %s142 = sphi 0, %s141
    %s158 = sphi 0, %s142
    %s164 = sphi 0, %s166
    %s167 = sphi 0, %s164
    %s168 = sphi 0, %s167
    %s184 = sphi 0, %s168
  $region4: #{geometric_attention_forward.3} parent=0 // loop_header_branch
    %16 = sbr.rel (%p14) target = $region8
  $region5: #{geometric_attention_forward.3} parent=0 // loop_body
    %s18 = ssub.s32 %s13, 1
    %s19 = ssub.s32 %s13, 2
    %s20 = sadd.s32 %s13, 1
    %s21 = ssub.s32 %s13, %s20
    %p22 = scmp.eq.s32.totalorder %s21, 0
    %s24 = sadd.s32 %s23, 1
    %s25 = scalar_select %p22, %s23, %s24
    %p28 = pneg %p22
    %p29 = scmp.eq.s32.totalorder %s13, 1
    %p30 = por %p28, %p29
    %p31 = scmp.ne.s32.totalorder %s23, %s26
    %p32 = scmp.eq.s32.totalorder %s13, 0
    %p33 = por %p31, %p32
    %p34 = scmp.ne.s32.totalorder %s23, %s26
    %p35 = scmp.eq.s32.totalorder %s18, 1
    %p36 = por %p34, %p35
    %p37 = scmp.ne.s32.totalorder %s26, %s27
    %p38 = scmp.eq.s32.totalorder %s18, 0
    %p39 = por %p37, %p38
    %p40 = scmp.ne.s32.totalorder %s26, %s27
    %p41 = scmp.eq.s32.totalorder %s19, 1
    %p42 = por %p40, %p41
    %p44 = scmp.ne.s32.totalorder %s27, %s43
    %p45 = scmp.eq.s32.totalorder %s19, 0
    %p46 = por %p44, %p45
    %s48 = sadd.s32 %s47, 1
    %p51 = scmp.eq.s32.totalorder %s13, 1
    %p52 = scmp.ne.s32.totalorder %s47, %s49
    %p53 = scmp.eq.s32.totalorder %s13, 0
    %p54 = por %p52, %p53
    %p55 = scmp.ne.s32.totalorder %s47, %s49
    %p56 = scmp.eq.s32.totalorder %s18, 1
    %p57 = por %p55, %p56
    %p58 = scmp.ne.s32.totalorder %s49, %s50
    %p59 = scmp.eq.s32.totalorder %s18, 0
    %p60 = por %p58, %p59
    %p61 = scmp.ne.s32.totalorder %s49, %s50
    %p62 = scmp.eq.s32.totalorder %s19, 1
    %p63 = por %p61, %p62
    %p65 = scmp.ne.s32.totalorder %s50, %s64
    %p66 = scmp.eq.s32.totalorder %s19, 0
    %p67 = por %p65, %p66
    %s69 = sadd.s32 %s68, 1
    %p72 = scmp.eq.s32.totalorder %s13, 1
    %p73 = scmp.ne.s32.totalorder %s68, %s70
    %p74 = scmp.eq.s32.totalorder %s13, 0
    %p75 = por %p73, %p74
    %p76 = scmp.ne.s32.totalorder %s68, %s70
    %p77 = scmp.eq.s32.totalorder %s18, 1
    %p78 = por %p76, %p77
    %p79 = scmp.ne.s32.totalorder %s70, %s71
    %p80 = scmp.eq.s32.totalorder %s18, 0
    %p81 = por %p79, %p80
    %p82 = scmp.ne.s32.totalorder %s70, %s71
    %p83 = scmp.eq.s32.totalorder %s19, 1
    %p84 = por %p82, %p83
    %p86 = scmp.ne.s32.totalorder %s71, %s85
    %p87 = scmp.eq.s32.totalorder %s19, 0
    %p88 = por %p86, %p87
    %s90 = sadd.s32 %s89, 1
    %p93 = scmp.eq.s32.totalorder %s13, 1
    %p94 = scmp.ne.s32.totalorder %s89, %s91
    %p95 = scmp.eq.s32.totalorder %s13, 0
    %p96 = por %p94, %p95
    %p97 = scmp.ne.s32.totalorder %s89, %s91
    %p98 = scmp.eq.s32.totalorder %s18, 1
    %p99 = por %p97, %p98
    %p100 = scmp.ne.s32.totalorder %s91, %s92
    %p101 = scmp.eq.s32.totalorder %s18, 0
    %p102 = por %p100, %p101
    %p103 = scmp.ne.s32.totalorder %s91, %s92
    %p104 = scmp.eq.s32.totalorder %s19, 1
    %p105 = por %p103, %p104
    %p107 = scmp.ne.s32.totalorder %s92, %s106
    %p108 = scmp.eq.s32.totalorder %s19, 0
    %p109 = por %p107, %p108
    %s110 = ssub.s32 %s13, %s20
    %p111 = scmp.eq.s32.totalorder %s110, 0
    %s113 = sadd.s32 %s112, 1
    %s114 = scalar_select %p111, %s112, %s113
    %p117 = pneg %p111
    %p118 = scmp.eq.s32.totalorder %s13, 1
    %p119 = por %p117, %p118
    %p120 = scmp.ne.s32.totalorder %s112, %s115
    %p121 = scmp.eq.s32.totalorder %s13, 0
    %p122 = por %p120, %p121
    %p123 = scmp.ne.s32.totalorder %s112, %s115
    %p124 = scmp.eq.s32.totalorder %s18, 1
    %p125 = por %p123, %p124
    %p126 = scmp.ne.s32.totalorder %s115, %s116
    %p127 = scmp.eq.s32.totalorder %s18, 0
    %p128 = por %p126, %p127
    %p129 = scmp.ne.s32.totalorder %s115, %s116
    %p130 = scmp.eq.s32.totalorder %s19, 1
    %p131 = por %p129, %p130
    %p133 = scmp.ne.s32.totalorder %s116, %s132
    %p134 = scmp.eq.s32.totalorder %s19, 0
    %p135 = por %p133, %p134
    %s136 = ssub.s32 %s13, %s20
    %p137 = scmp.eq.s32.totalorder %s136, 0
    %s139 = sadd.s32 %s138, 1
    %s140 = scalar_select %p137, %s138, %s139
    %p143 = pneg %p137
    %p144 = scmp.eq.s32.totalorder %s13, 1
    %p145 = por %p143, %p144
    %p146 = scmp.ne.s32.totalorder %s138, %s141
    %p147 = scmp.eq.s32.totalorder %s13, 0
    %p148 = por %p146, %p147
    %p149 = scmp.ne.s32.totalorder %s138, %s141
    %p150 = scmp.eq.s32.totalorder %s18, 1
    %p151 = por %p149, %p150
    %p152 = scmp.ne.s32.totalorder %s141, %s142
    %p153 = scmp.eq.s32.totalorder %s18, 0
    %p154 = por %p152, %p153
    %p155 = scmp.ne.s32.totalorder %s141, %s142
    %p156 = scmp.eq.s32.totalorder %s19, 1
    %p157 = por %p155, %p156
    %p159 = scmp.ne.s32.totalorder %s142, %s158
    %p160 = scmp.eq.s32.totalorder %s19, 0
    %p161 = por %p159, %p160
    %s162 = ssub.s32 %s13, %s20
    %p163 = scmp.eq.s32.totalorder %s162, 0
    %s165 = sadd.s32 %s164, 1
    %s166 = scalar_select %p163, %s164, %s165
    %p169 = pneg %p163
    %p170 = scmp.eq.s32.totalorder %s13, 1
    %p171 = por %p169, %p170
    %p172 = scmp.ne.s32.totalorder %s164, %s167
    %p173 = scmp.eq.s32.totalorder %s13, 0
    %p174 = por %p172, %p173
    %p175 = scmp.ne.s32.totalorder %s164, %s167
    %p176 = scmp.eq.s32.totalorder %s18, 1
    %p177 = por %p175, %p176
    %p178 = scmp.ne.s32.totalorder %s167, %s168
    %p179 = scmp.eq.s32.totalorder %s18, 0
    %p180 = por %p178, %p179
    %p181 = scmp.ne.s32.totalorder %s167, %s168
    %p182 = scmp.eq.s32.totalorder %s19, 1
    %p183 = por %p181, %p182
    %p185 = scmp.ne.s32.totalorder %s168, %s184
    %p186 = scmp.eq.s32.totalorder %s19, 0
    %p187 = por %p185, %p186
    %p188 = scmp.le.s32.totalorder 1, %s13
    %p189 = scmp.lt.s32.totalorder %s13, 3
    %p190 = pnand %p188, %p189
    %p191 = pneg %p190
    // Predicated region
    $region9: #{geometric_attention_forward.3} parent=5 // pred_check
      _
    $region10: #{geometric_attention_forward.3} parent=5 // pred_check_branch
      %193 = sbr.rel (%p190) target = $region12
    $region11: #{geometric_attention_forward.3} parent=5 // pred_region
      %s194 = ssub.s32 %s13, 1
      // Predicated region
      $region13: #{geometric_attention_forward.3} parent=11 // pred_check
        %p195 = pneg %p60
      $region14: #{geometric_attention_forward.3} parent=11 // pred_check_branch
        %197 = sbr.rel (%p195) target = $region16
      $region15: #{geometric_attention_forward.3} parent=11 // pred_region
        _
      $region16: #{geometric_attention_forward.3} parent=11 // pred_fallthru
        _
      // Predicated region
      $region17: #{geometric_attention_forward.3} parent=11 // pred_check
        %p198 = pneg %p81
      $region18: #{geometric_attention_forward.3} parent=11 // pred_check_branch
        %200 = sbr.rel (%p198) target = $region20
      $region19: #{geometric_attention_forward.3} parent=11 // pred_region
        _
      $region20: #{geometric_attention_forward.3} parent=11 // pred_fallthru
        _
      // Predicated region
      $region21: #{geometric_attention_forward.3} parent=11 // pred_check
        %p201 = pneg %p102
      $region22: #{geometric_attention_forward.3} parent=11 // pred_check_branch
        %203 = sbr.rel (%p201) target = $region24
      $region23: #{geometric_attention_forward.3} parent=11 // pred_region
        _
      $region24: #{geometric_attention_forward.3} parent=11 // pred_fallthru
        _
    $region12: #{geometric_attention_forward.3} parent=5 // pred_fallthru
      _
    %p204 = scmp.lt.s32.totalorder %s13, 2
    // Predicated region
    $region25: #{geometric_attention_forward.3} parent=5 // pred_check
      %p205 = pneg %p204
    $region26: #{geometric_attention_forward.3} parent=5 // pred_check_branch
      %207 = sbr.rel (%p205) target = $region28
    $region27: #{geometric_attention_forward.3} parent=5 // pred_region
      // Predicated region
      $region29: #{geometric_attention_forward.3} parent=27 // pred_check
        %p208 = pneg %p33
      $region30: #{geometric_attention_forward.3} parent=27 // pred_check_branch
        %210 = sbr.rel (%p208) target = $region32
      $region31: #{geometric_attention_forward.3} parent=27 // pred_region
        %p211 = scmp.lt.s32.totalorder %s13, 1
        %s212 = scalar_select %p211, %s13, 1
        %s213 = smul.addr %s212, 4
        %s214 = scalar_lea.vmem %s0, %s213
      $region32: #{geometric_attention_forward.3} parent=27 // pred_fallthru
        _
    $region28: #{geometric_attention_forward.3} parent=5 // pred_fallthru
      _
    %p215 = scmp.le.s32.totalorder 1, %s13
    %p216 = scmp.lt.s32.totalorder %s13, 3
    %p217 = pnand %p215, %p216
    %p218 = pneg %p217
    // Predicated region
    $region33: #{geometric_attention_forward.3} parent=5 // pred_check
      _
    $region34: #{geometric_attention_forward.3} parent=5 // pred_check_branch
      %220 = sbr.rel (%p217) target = $region36
    $region35: #{geometric_attention_forward.3} parent=5 // pred_region
      %s221 = ssub.s32 %s13, 1
      %p222 = scmp.lt.s32.totalorder %s18, 1
      %s223 = scalar_select %p222, %s18, 1
      %s224 = smul.addr %s223, 4
      %s225 = scalar_lea.vmem %s0, %s224
      %p226 = pneg %p39
      %p227 = pneg %p36
      %p228 = pneg %p60
      %p229 = pneg %p57
      %p230 = pneg %p81
      %p231 = pneg %p78
      %p232 = pneg %p102
      %p233 = pneg %p99
      %p234 = pneg %p128
      %p235 = pneg %p125
      %p236 = scmp.lt.s32.totalorder %s18, 1
      %s237 = scalar_select %p236, %s18, 1
      %s238 = smul.addr %s237, 2
      %s239 = smul.addr %s238, 4
      %s240 = scalar_lea.vmem %s4, %s239
      %p241 = pneg %p154
      %p242 = pneg %p151
      %p243 = scmp.lt.s32.totalorder %s18, 1
      %s244 = scalar_select %p243, %s18, 1
      %s245 = smul.addr %s244, 4
      %s246 = scalar_lea.vmem %s5, %s245
      %p247 = pneg %p180
      %p248 = pneg %p177
      %p249 = scmp.lt.s32.totalorder %s18, 1
      %s250 = scalar_select %p249, %s18, 1
      %s251 = smul.addr %s250, 4
      %s252 = scalar_lea.vmem %s6, %s251
      %p253 = scmp.lt.s32.totalorder %s18, 1
      %s254 = scalar_select %p253, %s18, 1
      %s255 = smul.addr %s254, 4
      %s256 = scalar_lea.vmem %s0, %s255
      %p257 = scmp.lt.s32.totalorder %s18, 1
      %s258 = scalar_select %p257, %s18, 1
      %s259 = smul.addr %s258, 2
      %s260 = smul.addr %s259, 4
      %s261 = scalar_lea.vmem %s4, %s260
      %p262 = scmp.lt.s32.totalorder %s18, 1
      %s263 = scalar_select %p262, %s18, 1
      %s264 = smul.addr %s263, 4
      %s265 = scalar_lea.vmem %s5, %s264
      %p266 = scmp.lt.s32.totalorder %s18, 1
      %s267 = scalar_select %p266, %s18, 1
      %s268 = smul.addr %s267, 4
      %s269 = scalar_lea.vmem %s6, %s268
      %v271 = vld [vmem:[%s256] sm:$0xf]
      %v272 = vld [vmem:[%s1] sm:$0xff]
      %v273 = vld [vmem:[%s1 + $0x8] sm:$0xff]
      %v274 = vld [vmem:[%s1 + $0x10] sm:$0xff]
      %v275 = vld [vmem:[%s1 + $0x18] sm:$0xff]
      %v276 = vld [vmem:[%s1 + $0x20] sm:$0xff]
      %v277 = vld [vmem:[%s1 + $0x28] sm:$0xff]
      %v278 = vld [vmem:[%s1 + $0x30] sm:$0xff]
      %v279 = vld [vmem:[%s1 + $0x38] sm:$0xff]
      %v288 = vunpack.c.l.b16 %v272
      %v289 = vunpack.c.h.b16 %v272
      %v290 = vunpack.c.l.b16 %v273
      %v291 = vunpack.c.h.b16 %v273
      %v292 = vunpack.c.l.b16 %v274
      %v293 = vunpack.c.h.b16 %v274
      %v294 = vunpack.c.l.b16 %v275
      %v295 = vunpack.c.h.b16 %v275
      %v296 = vunpack.c.l.b16 %v276
      %v297 = vunpack.c.h.b16 %v276
      %v298 = vunpack.c.l.b16 %v277
      %v299 = vunpack.c.h.b16 %v277
      %v300 = vunpack.c.l.b16 %v278
      %v301 = vunpack.c.h.b16 %v278
      %v302 = vunpack.c.l.b16 %v279
      %v303 = vunpack.c.h.b16 %v279
      %v304 = vpack.c.b16 %v290, %v288
      %v305 = vpack.c.b16 %v291, %v289
      %v306 = vpack.c.b16 %v294, %v292
      %v307 = vpack.c.b16 %v295, %v293
      %v308 = vpack.c.b16 %v298, %v296
      %v309 = vpack.c.b16 %v299, %v297
      %v310 = vpack.c.b16 %v302, %v300
      %v311 = vpack.c.b16 %v303, %v301
      %vm320 = vcmask 523264
      %v322 = vsel %vm320, %v271, 0
      %324 = vmatprep.subr.bf16.mxu0 %v305
      %325 = vmatpush1.bf16.msra.mxu0 %v304
      %326 = vmatprep.subr.bf16.mxu0 %v307
      %327 = vmatpush1.bf16.msra.mxu0 %v306
      %328 = vmatprep.subr.bf16.mxu0 %v309
      %329 = vmatpush1.bf16.msra.mxu0 %v308
      %330 = vmatprep.subr.bf16.mxu0 %v311
      %331 = vmatpush1.bf16.msra.mxu0 %v310
      %332 = vmatprep.subr.bf16.mxu0 0
      %333 = vmatpush1.bf16.msra.mxu0 0
      %334 = vmatprep.subr.bf16.mxu0 0
      %335 = vmatpush1.bf16.msra.mxu0 0
      %336 = vmatprep.subr.bf16.mxu0 0
      %337 = vmatpush1.bf16.msra.mxu0 0
      %338 = vmatprep.subr.bf16.mxu0 0
      %339 = vmatpush1.bf16.msra.mxu0 0
      %340 = vmatprep.subr.bf16.mxu0 0
      %341 = vmatpush1.bf16.msra.mxu0 0
      %342 = vmatprep.subr.bf16.mxu0 0
      %343 = vmatpush1.bf16.msra.mxu0 0
      %344 = vmatprep.subr.bf16.mxu0 0
      %345 = vmatpush1.bf16.msra.mxu0 0
      %346 = vmatprep.subr.bf16.mxu0 0
      %347 = vmatpush1.bf16.msra.mxu0 0
      %348 = vmatprep.subr.bf16.mxu0 0
      %349 = vmatpush1.bf16.msra.mxu0 0
      %350 = vmatprep.subr.bf16.mxu0 0
      %351 = vmatpush1.bf16.msra.mxu0 0
      %352 = vmatprep.subr.bf16.mxu0 0
      %353 = vmatpush1.bf16.msra.mxu0 0
      %354 = vmatprep.subr.bf16.mxu0 0
      %355 = vmatpush1.bf16.msra.mxu0 0
      %356 = vmatprep.mubr.bf16.mxu0 0
      %357 = vmatmul.mubr.bf16.gmra.mrb[0].mxu0 %v322
      %v358 = vpop.f32.mrb[0].mxu0
      %v359 = vadd.f32 0.0, %v358
      %v360 = vpop.f32.mrb[0].mxu0
      %v361 = vadd.f32 0.0, %v360
      %v362 = vpop.f32.mrb[0].mxu0
      %v363 = vpop.f32.mrb[0].mxu0
      %364 = vdwg.mxu0
      %v365 = vpack.c.bf16 %v359, %v359
      %v366 = vpack.c.bf16 %v361, %v361
      %v369 = vunpack.c.l.b16 %v365
      %v370 = vunpack.c.l.b16 %v366
      %v371 = vpack.c.b16 %v370, %v369
      %373 = vst [vmem:[%s261] sm:$0xff] %v371
      %v374 = vld [vmem:[%s2] sm:$0xf]
      %v375 = vld [vmem:[%s2 + $0x4] sm:$0xf]
      %v376 = vld [vmem:[%s2 + $0x8] sm:$0xf]
      %v377 = vld [vmem:[%s2 + $0xc] sm:$0xf]
      %v378 = vld [vmem:[%s2 + $0x10] sm:$0xf]
      %v379 = vld [vmem:[%s2 + $0x14] sm:$0xf]
      %v380 = vld [vmem:[%s2 + $0x18] sm:$0xf]
      %v381 = vld [vmem:[%s2 + $0x1c] sm:$0xf]
      %v390 = vunpack.c.l.b16 %v374
      %v391 = vunpack.c.l.b16 %v375
      %v392 = vunpack.c.l.b16 %v376
      %v393 = vunpack.c.l.b16 %v377
      %v394 = vunpack.c.l.b16 %v378
      %v395 = vunpack.c.l.b16 %v379
      %v396 = vunpack.c.l.b16 %v380
      %v397 = vunpack.c.l.b16 %v381
      %v398 = vpack.c.b16 %v391, %v390
      %v399 = vpack.c.b16 %v393, %v392
      %v400 = vpack.c.b16 %v395, %v394
      %v401 = vpack.c.b16 %v397, %v396
      %406 = vmatprep.subr.bf16.mxu0 0
      %407 = vmatpush1.bf16.msra.mxu0 %v398
      %408 = vmatprep.subr.bf16.mxu0 0
      %409 = vmatpush1.bf16.msra.mxu0 %v399
      %410 = vmatprep.subr.bf16.mxu0 0
      %411 = vmatpush1.bf16.msra.mxu0 %v400
      %412 = vmatprep.subr.bf16.mxu0 0
      %413 = vmatpush1.bf16.msra.mxu0 %v401
      %414 = vmatprep.subr.bf16.mxu0 0
      %415 = vmatpush1.bf16.msra.mxu0 0
      %416 = vmatprep.subr.bf16.mxu0 0
      %417 = vmatpush1.bf16.msra.mxu0 0
      %418 = vmatprep.subr.bf16.mxu0 0
      %419 = vmatpush1.bf16.msra.mxu0 0
      %420 = vmatprep.subr.bf16.mxu0 0
      %421 = vmatpush1.bf16.msra.mxu0 0
      %422 = vmatprep.subr.bf16.mxu0 0
      %423 = vmatpush1.bf16.msra.mxu0 0
      %424 = vmatprep.subr.bf16.mxu0 0
      %425 = vmatpush1.bf16.msra.mxu0 0
      %426 = vmatprep.subr.bf16.mxu0 0
      %427 = vmatpush1.bf16.msra.mxu0 0
      %428 = vmatprep.subr.bf16.mxu0 0
      %429 = vmatpush1.bf16.msra.mxu0 0
      %430 = vmatprep.subr.bf16.mxu0 0
      %431 = vmatpush1.bf16.msra.mxu0 0
      %432 = vmatprep.subr.bf16.mxu0 0
      %433 = vmatpush1.bf16.msra.mxu0 0
      %434 = vmatprep.subr.bf16.mxu0 0
      %435 = vmatpush1.bf16.msra.mxu0 0
      %436 = vmatprep.subr.bf16.mxu0 0
      %437 = vmatpush1.bf16.msra.mxu0 0
      %438 = vmatprep.mubr.bf16.mxu0 0
      %439 = vmatmul.mubr.bf16.gmra.mrb[0].mxu0 %v322
      %v440 = vpop.f32.mrb[0].mxu0
      %v441 = vadd.f32 0.0, %v440
      %v442 = vpop.f32.mrb[0].mxu0
      %v443 = vpop.f32.mrb[0].mxu0
      %v444 = vpop.f32.mrb[0].mxu0
      %445 = vdwg.mxu0
      %v446 = vpack.c.bf16 %v441, %v441
      %447 = vst [vmem:[%s265] sm:$0xf] %v446
      %v448 = vld [vmem:[%s3] sm:$0xf]
      %v449 = vld [vmem:[%s3 + $0x4] sm:$0xf]
      %v450 = vld [vmem:[%s3 + $0x8] sm:$0xf]
      %v451 = vld [vmem:[%s3 + $0xc] sm:$0xf]
      %v452 = vld [vmem:[%s3 + $0x10] sm:$0xf]
      %v453 = vld [vmem:[%s3 + $0x14] sm:$0xf]
      %v454 = vld [vmem:[%s3 + $0x18] sm:$0xf]
      %v455 = vld [vmem:[%s3 + $0x1c] sm:$0xf]
      %v464 = vunpack.c.l.b16 %v448
      %v465 = vunpack.c.l.b16 %v449
      %v466 = vunpack.c.l.b16 %v450
      %v467 = vunpack.c.l.b16 %v451
      %v468 = vunpack.c.l.b16 %v452
      %v469 = vunpack.c.l.b16 %v453
      %v470 = vunpack.c.l.b16 %v454
      %v471 = vunpack.c.l.b16 %v455
      %v472 = vpack.c.b16 %v465, %v464
      %v473 = vpack.c.b16 %v467, %v466
      %v474 = vpack.c.b16 %v469, %v468
      %v475 = vpack.c.b16 %v471, %v470
      %480 = vmatprep.subr.bf16.mxu0 0
      %481 = vmatpush1.bf16.msra.mxu0 %v472
      %482 = vmatprep.subr.bf16.mxu0 0
      %483 = vmatpush1.bf16.msra.mxu0 %v473
      %484 = vmatprep.subr.bf16.mxu0 0
      %485 = vmatpush1.bf16.msra.mxu0 %v474
      %486 = vmatprep.subr.bf16.mxu0 0
      %487 = vmatpush1.bf16.msra.mxu0 %v475
      %488 = vmatprep.subr.bf16.mxu0 0
      %489 = vmatpush1.bf16.msra.mxu0 0
      %490 = vmatprep.subr.bf16.mxu0 0
      %491 = vmatpush1.bf16.msra.mxu0 0
      %492 = vmatprep.subr.bf16.mxu0 0
      %493 = vmatpush1.bf16.msra.mxu0 0
      %494 = vmatprep.subr.bf16.mxu0 0
      %495 = vmatpush1.bf16.msra.mxu0 0
      %496 = vmatprep.subr.bf16.mxu0 0
      %497 = vmatpush1.bf16.msra.mxu0 0
      %498 = vmatprep.subr.bf16.mxu0 0
      %499 = vmatpush1.bf16.msra.mxu0 0
      %500 = vmatprep.subr.bf16.mxu0 0
      %501 = vmatpush1.bf16.msra.mxu0 0
      %502 = vmatprep.subr.bf16.mxu0 0
      %503 = vmatpush1.bf16.msra.mxu0 0
      %504 = vmatprep.subr.bf16.mxu0 0
      %505 = vmatpush1.bf16.msra.mxu0 0
      %506 = vmatprep.subr.bf16.mxu0 0
      %507 = vmatpush1.bf16.msra.mxu0 0
      %508 = vmatprep.subr.bf16.mxu0 0
      %509 = vmatpush1.bf16.msra.mxu0 0
      %510 = vmatprep.subr.bf16.mxu0 0
      %511 = vmatpush1.bf16.msra.mxu0 0
      %512 = vmatprep.mubr.bf16.mxu0 0
      %513 = vmatmul.mubr.bf16.gmra.mrb[0].mxu0 %v322
      %v514 = vpop.f32.mrb[0].mxu0
      %v515 = vadd.f32 0.0, %v514
      %v516 = vpop.f32.mrb[0].mxu0
      %v517 = vpop.f32.mrb[0].mxu0
      %v518 = vpop.f32.mrb[0].mxu0
      %519 = vdwg.mxu0
      %v520 = vpack.c.bf16 %v515, %v515
      %521 = vst [vmem:[%s269] sm:$0xf] %v520
      %p522 = scmp.lt.s32.totalorder %s18, 1
      %s523 = scalar_select %p522, %s18, 1
      %s524 = smul.addr %s523, 2
      %s525 = smul.addr %s524, 4
      %s526 = scalar_lea.vmem %s4, %s525
      %p527 = scmp.lt.s32.totalorder %s18, 1
      %s528 = scalar_select %p527, %s18, 1
      %s529 = smul.addr %s528, 4
      %s530 = scalar_lea.vmem %s5, %s529
      %p531 = scmp.lt.s32.totalorder %s18, 1
      %s532 = scalar_select %p531, %s18, 1
      %s533 = smul.addr %s532, 4
      %s534 = scalar_lea.vmem %s6, %s533
      // Predicated region
      $region37: #{geometric_attention_forward.3} parent=35 // pred_check
        %p535 = pneg %p125
      $region38: #{geometric_attention_forward.3} parent=35 // pred_check_branch
        %537 = sbr.rel (%p535) target = $region40
      $region39: #{geometric_attention_forward.3} parent=35 // pred_region
        _
      $region40: #{geometric_attention_forward.3} parent=35 // pred_fallthru
        _
      // Predicated region
      $region41: #{geometric_attention_forward.3} parent=35 // pred_check
        %p538 = pneg %p151
      $region42: #{geometric_attention_forward.3} parent=35 // pred_check_branch
        %540 = sbr.rel (%p538) target = $region44
      $region43: #{geometric_attention_forward.3} parent=35 // pred_region
        _
      $region44: #{geometric_attention_forward.3} parent=35 // pred_fallthru
        _
      // Predicated region
      $region45: #{geometric_attention_forward.3} parent=35 // pred_check
        %p541 = pneg %p177
      $region46: #{geometric_attention_forward.3} parent=35 // pred_check_branch
        %543 = sbr.rel (%p541) target = $region48
      $region47: #{geometric_attention_forward.3} parent=35 // pred_region
        _
      $region48: #{geometric_attention_forward.3} parent=35 // pred_fallthru
        _
    $region36: #{geometric_attention_forward.3} parent=5 // pred_fallthru
      _
    %p544 = scmp.le.s32.totalorder 2, %s13
    // Predicated region
    $region49: #{geometric_attention_forward.3} parent=5 // pred_check
      %p545 = pneg %p544
    $region50: #{geometric_attention_forward.3} parent=5 // pred_check_branch
      %547 = sbr.rel (%p545) target = $region52
    $region51: #{geometric_attention_forward.3} parent=5 // pred_region
      %s548 = ssub.s32 %s13, 2
      // Predicated region
      $region53: #{geometric_attention_forward.3} parent=51 // pred_check
        %p549 = pneg %p131
      $region54: #{geometric_attention_forward.3} parent=51 // pred_check_branch
        %551 = sbr.rel (%p549) target = $region56
      $region55: #{geometric_attention_forward.3} parent=51 // pred_region
        %p552 = scmp.lt.s32.totalorder %s19, 1
        %s553 = scalar_select %p552, %s19, 1
        %s554 = smul.addr %s553, 2
        %s555 = smul.addr %s554, 4
        %s556 = scalar_lea.vmem %s4, %s555
      $region56: #{geometric_attention_forward.3} parent=51 // pred_fallthru
        _
      // Predicated region
      $region57: #{geometric_attention_forward.3} parent=51 // pred_check
        %p557 = pneg %p157
      $region58: #{geometric_attention_forward.3} parent=51 // pred_check_branch
        %559 = sbr.rel (%p557) target = $region60
      $region59: #{geometric_attention_forward.3} parent=51 // pred_region
        %p560 = scmp.lt.s32.totalorder %s19, 1
        %s561 = scalar_select %p560, %s19, 1
        %s562 = smul.addr %s561, 4
        %s563 = scalar_lea.vmem %s5, %s562
      $region60: #{geometric_attention_forward.3} parent=51 // pred_fallthru
        _
      // Predicated region
      $region61: #{geometric_attention_forward.3} parent=51 // pred_check
        %p564 = pneg %p183
      $region62: #{geometric_attention_forward.3} parent=51 // pred_check_branch
        %566 = sbr.rel (%p564) target = $region64
      $region63: #{geometric_attention_forward.3} parent=51 // pred_region
        %p567 = scmp.lt.s32.totalorder %s19, 1
        %s568 = scalar_select %p567, %s19, 1
        %s569 = smul.addr %s568, 4
        %s570 = scalar_lea.vmem %s6, %s569
      $region64: #{geometric_attention_forward.3} parent=51 // pred_fallthru
        _
    $region52: #{geometric_attention_forward.3} parent=5 // pred_fallthru
      _
  $region6: #{geometric_attention_forward.3} parent=0 // loop_footer
    %s17 = sadd.s32 1, %s13
  $region7: #{geometric_attention_forward.3} parent=0 // loop_footer_branch
    %12 = sbr.rel target = $region3
  $region8: #{geometric_attention_forward.3} parent=0 // loop_exit
    _

</llo_original>
